<compile_context>
chip_gen: v7x
topology: tpu7x:2x2x1
jax: 0.10.0
libtpu: 0.0.40
codegen_flags: <defaults>
</compile_context>

<pallas_src>
import math

import jax
import jax.numpy as jnp
import numpy as np
from jax.experimental import pallas as pl
from jax.experimental.pallas import tpu as pltpu


def _aff_attn_kernel(aff_ref, h_ref, w3t_ref, w4t_ref, o_ref):
    """One grid step = Bb independent graphs, all operands resident in VMEM.

    aff_ref : (Bb, N, M)    bipartite affinity blocks (compute dtype)
    h_ref   : (Bb, P, Din)  node features, P = N + M (compute dtype)
    w3t_ref : (Din, Dout)   fc_3.weight^T, resident across the grid
    w4t_ref : (Din, Dout)   fc_4.weight^T, resident across the grid
    o_ref   : (Bb, P, Dout) f32 output
    """
    f32 = jnp.float32
    bb, n_t, _ = aff_ref.shape           # n_t = (padded) tracklet count
    _, p_n, d_in = h_ref.shape
    d_out = w3t_ref.shape[1]

    # Affinity: loaded in compute dtype (HBM bytes), aggregated in f32.  The transpose
    # happens in-kernel (XLU) instead of streaming a second pre-transposed copy.
    aff = aff_ref[...].astype(f32)                       # (Bb, N, M)
    aff_t = jnp.swapaxes(aff, 1, 2)                      # (Bb, M, N)

    # Feature projections: graphs folded onto sublanes -> one fat 2D MXU pass per
    # weight, f32 accumulation.  P is a multiple of the sublane tile by construction,
    # so the reshapes are tile-aligned (no relayout copies).
    zf = h_ref[...].reshape(bb * p_n, d_in)
    z3 = jnp.dot(zf, w3t_ref[...], preferred_element_type=f32).reshape(bb, p_n, d_out)
    z4 = jnp.dot(zf, w4t_ref[...], preferred_element_type=f32).reshape(bb, p_n, d_out)

    # Tile-aligned tracklet / detection split (n_t is a multiple of 8 for f32 z3/z4).
    z3_top, z3_bot = z3[:, :n_t, :], z3[:, n_t:, :]
    z4_top, z4_bot = z4[:, :n_t, :], z4[:, n_t:, :]

    # Bipartite neighborhood aggregation (batched canonical matmuls on the MXU).
    agg_top = jnp.einsum('bnm,bmd->bnd', aff, z3_bot, preferred_element_type=f32)
    agg_bot = jnp.einsum('bmn,bnd->bmd', aff_t, z3_top, preferred_element_type=f32)

    # Degrees in-kernel: lane reductions over the VMEM-resident affinity block.
    # (The self-loop of A contributes z_i - z_i = 0, so it is dropped from both
    #  the aggregation and the degree -- exact cancellation.)
    deg_top = jnp.sum(aff, axis=-1, keepdims=True)       # (Bb, N, 1) row sums
    deg_bot = jnp.sum(aff_t, axis=-1, keepdims=True)     # (Bb, M, 1) col sums

    # Write the two node populations directly (no sublane concatenate, no extra pass).
    o_ref[:, :n_t, :] = (z4_top + agg_top - deg_top * z3_top).astype(o_ref.dtype)
    o_ref[:, n_t:, :] = (z4_bot + agg_bot - deg_bot * z3_bot).astype(o_ref.dtype)


def _round_up(x, m):
    return ((x + m - 1) // m) * m


def affinity_attention_forward(aff_mat, h, w3, w4, *,
                               compute_dtype=jnp.float32,
                               graphs_per_block=8):
    """Pallas forward of AffinityAttentionLayer.

    aff_mat : (N, M) or (B, N, M) affinity matrix (tracklets x detections)
    h       : (N+M, Din) or (B, N+M, Din) node features
    w3, w4  : (Dout, Din) -- PyTorch nn.Linear weight layout (fc_3 / fc_4, no bias)
    compute_dtype : dtype of HBM-streamed operands / MXU projection operands
                    (f32 or bf16); accumulation and the elementwise tail are f32.
    Returns (..., N+M, Dout) float32.
    """
    squeeze = aff_mat.ndim == 2
    if squeeze:
        aff_mat = aff_mat[None]
        h = h[None]

    B, N, M = aff_mat.shape
    Bh, P, Din = h.shape
    assert Bh == B and P == N + M
    assert N > 0 and M > 0, "graphs with no tracklets or no detections are degenerate"
    assert w3.shape == w4.shape and w3.shape[1] == Din
    Dout = w3.shape[0]

    cdt = jnp.dtype(compute_dtype)
    esz = cdt.itemsize
    sub = {4: 8, 2: 16, 1: 32}[esz]          # sublane rows per tile of compute dtype

    # Pad tracklet/detection counts to the sublane tile: keeps the in-kernel row
    # split, the flatten reshape and the output stores tile-aligned.  Zero-padded
    # rows/cols contribute nothing and are sliced off afterwards.
    Np, Mp = _round_up(N, sub), _round_up(M, sub)
    Pp = Np + Mp

    # Graphs per grid step: big enough to amortize per-step overhead, small enough
    # that the double-buffered working set stays far inside v7x's 64 MiB VMEM.
    per_graph = Np * Mp * esz + Pp * Din * esz + Pp * Dout * 4
    budget = 8 * 1024 * 1024
    Bb = max(1, min(graphs_per_block, B, budget // max(1, 2 * per_graph)))
    if B >= 2:                               # >= 2 grid steps so both v7x TCs get work
        Bb = min(Bb, _round_up(B, 2) // 2)
    Bpad = _round_up(B, Bb)
    grid = (Bpad // Bb,)

    # --- padding / casting glue (plain XLA; no dense (P,P) adjacency anywhere) ---
    aff_c = aff_mat.astype(cdt)
    h_c = h.astype(cdt)
    if (Np, Mp) != (N, M):
        aff_c = jnp.pad(aff_c, ((0, 0), (0, Np - N), (0, Mp - M)))
        h_c = jnp.concatenate(
            [jnp.pad(h_c[:, :N, :], ((0, 0), (0, Np - N), (0, 0))),
             jnp.pad(h_c[:, N:, :], ((0, 0), (0, Mp - M), (0, 0)))], axis=1)
    if Bpad != B:
        aff_c = jnp.pad(aff_c, ((0, Bpad - B), (0, 0), (0, 0)))
        h_c = jnp.pad(h_c, ((0, Bpad - B), (0, 0), (0, 0)))

    w3t = jnp.asarray(w3).T.astype(cdt)      # (Din, Dout), resident across the grid
    w4t = jnp.asarray(w4).T.astype(cdt)

    flops = Bpad * (4 * Pp * Din * Dout + 4 * Np * Mp * Dout)
    bytes_accessed = ((aff_c.size + h_c.size + w3t.size + w4t.size) * esz
                      + Bpad * Pp * Dout * 4)

    out_p = pl.pallas_call(
        _aff_attn_kernel,
        out_shape=jax.ShapeDtypeStruct((Bpad, Pp, Dout), jnp.float32),
        grid=grid,
        in_specs=[
            pl.BlockSpec((Bb, Np, Mp), lambda g: (g, 0, 0)),     # affinity blocks
            pl.BlockSpec((Bb, Pp, Din), lambda g: (g, 0, 0)),    # node features
            pl.BlockSpec((Din, Dout), lambda g: (0, 0)),         # W3^T (resident)
            pl.BlockSpec((Din, Dout), lambda g: (0, 0)),         # W4^T (resident)
        ],
        out_specs=pl.BlockSpec((Bb, Pp, Dout), lambda g: (g, 0, 0)),
        compiler_params=pltpu.CompilerParams(
            dimension_semantics=("parallel",),
            vmem_limit_bytes=32 * 1024 * 1024),
        cost_estimate=pl.CostEstimate(flops=flops, transcendentals=0,
                                      bytes_accessed=bytes_accessed),
    )(aff_c, h_c, w3t, w4t)

    # Un-pad: tracklets are rows [0:N], detections rows [Np:Np+M] of each graph.
    if (Np, Mp) != (N, M):
        out = jnp.concatenate([out_p[:B, :N, :], out_p[:B, Np:Np + M, :]], axis=1)
    elif Bpad != B:
        out = out_p[:B]
    else:
        out = out_p
    return out[0] if squeeze else out


def _reference(aff_mat, h, w3, w4):
    """Dense formulation, bit-faithful to the DGL message passing in the module."""
    N, M = aff_mat.shape[-2:]
    P = N + M

    def one(aff, z):
        A = jnp.zeros((P, P), jnp.float32)
        A = A.at[:N, N:].set(aff)
        A = A.at[N:, :N].set(aff.T)
        A = A + jnp.eye(P, dtype=jnp.float32)
        Z3 = z @ w3.T
        Z4 = z @ w4.T
        deg = jnp.sum(A, axis=0)[:, None]
        return Z4 + A.T @ Z3 - deg * Z3

    if aff_mat.ndim == 2:
        return one(aff_mat, h)
    return jax.vmap(one)(aff_mat, h)


def _xavier_normal(key, out_dim, in_dim, gain):
    std = gain * math.sqrt(2.0 / (in_dim + out_dim))
    return std * jax.random.normal(key, (out_dim, in_dim), jnp.float32)


if __name__ == "__main__":
    B = 16                     # batch of graphs; grid becomes 2 "parallel" steps of 8
    N, M = 8, 8                # tracklets x detections -> P = 16 graph nodes
    in_dim, out_dim = 32, 32

    key = jax.random.PRNGKey(0)
    k_aff, k_h, k_w3, k_w4 = jax.random.split(key, 4)

    aff_mat = jax.random.uniform(k_aff, (B, N, M), jnp.float32)
    h = jax.random.normal(k_h, (B, N + M, in_dim), jnp.float32)

    gain = math.sqrt(2.0)      # nn.init.calculate_gain('relu')
    w3 = _xavier_normal(k_w3, out_dim, in_dim, gain)   # fc_3.weight
    w4 = _xavier_normal(k_w4, out_dim, in_dim, gain)   # fc_4.weight

    ref = _reference(aff_mat, h, w3, w4)

    # f32 path (numerically faithful to the PyTorch module).
    out = jax.block_until_ready(affinity_attention_forward(aff_mat, h, w3, w4))
    np.testing.assert_allclose(np.asarray(out), np.asarray(ref), rtol=1e-4, atol=1e-4)

    # Single-graph (unbatched) entry point, matching the original module's signature.
    out1 = jax.block_until_ready(affinity_attention_forward(aff_mat[0], h[0], w3, w4))
    np.testing.assert_allclose(np.asarray(out1), np.asarray(ref[0]), rtol=1e-4, atol=1e-4)

    # bf16 HBM/MXU-operand path with f32 accumulation (exercises the 16-row padding).
    out_bf16 = jax.block_until_ready(
        affinity_attention_forward(aff_mat, h, w3, w4, compute_dtype=jnp.bfloat16))
    np.testing.assert_allclose(np.asarray(out_bf16), np.asarray(ref), rtol=5e-2, atol=1e-1)

    print("KERNEL_OK")
</pallas_src>

<mosaic_0001>
module attributes {stable_mosaic.version = 11 : i64} {
  func.func @_aff_attn_kernel(%arg0: i32, %arg1: memref<8x8x8xf32, #tpu.memory_space<vmem>>, %arg2: memref<8x16x32xf32, #tpu.memory_space<vmem>>, %arg3: memref<32x32xf32, #tpu.memory_space<vmem>>, %arg4: memref<32x32xf32, #tpu.memory_space<vmem>>, %arg5: memref<8x16x32xf32, #tpu.memory_space<vmem>>) attributes {dimension_semantics = [#tpu.dimension_semantics<parallel>], iteration_bounds = array<i64: 2>, scalar_prefetch = 0 : i64, scratch_operands = 0 : i64, tpu.core_type = #tpu.core_type<tc>, window_params = [{transform_indices = @transform_0, window_bounds = array<i64: 8, 8, 8>}, {transform_indices = @transform_1, window_bounds = array<i64: 8, 16, 32>}, {pipeline_mode = #tpu.pipeline_mode<synchronous>, transform_indices = @transform_2, window_bounds = array<i64: 32, 32>}, {pipeline_mode = #tpu.pipeline_mode<synchronous>, transform_indices = @transform_3, window_bounds = array<i64: 32, 32>}, {transform_indices = @transform_4, window_bounds = array<i64: 8, 16, 32>}]} {
    %c0 = arith.constant 0 : index
    %c0_0 = arith.constant 0 : index
    %c0_1 = arith.constant 0 : index
    %0 = vector.load %arg1[%c0, %c0_0, %c0_1] : memref<8x8x8xf32, #tpu.memory_space<vmem>>, vector<8x8x8xf32>
    %1 = tpu.transpose %0, [0, 2, 1] : vector<8x8x8xf32> -> vector<8x8x8xf32>
    %c0_2 = arith.constant 0 : index
    %c0_3 = arith.constant 0 : index
    %c0_4 = arith.constant 0 : index
    %2 = vector.load %arg2[%c0_2, %c0_3, %c0_4] : memref<8x16x32xf32, #tpu.memory_space<vmem>>, vector<8x16x32xf32>
    %3 = vector.shape_cast %2 : vector<8x16x32xf32> to vector<128x32xf32>
    %c0_5 = arith.constant 0 : index
    %c0_6 = arith.constant 0 : index
    %4 = vector.load %arg3[%c0_5, %c0_6] : memref<32x32xf32, #tpu.memory_space<vmem>>, vector<32x32xf32>
    %cst = arith.constant dense<0.000000e+00> : vector<128x32xf32>
    %5 = tpu.matmul %3, %4, %cst {dimension_numbers = #tpu.dot_dimension_numbers<[1], [0], [0], [1], [0, 0, 1, 1], [], []>} : vector<128x32xf32>, vector<32x32xf32>, vector<128x32xf32> -> vector<128x32xf32>
    %6 = vector.shape_cast %5 : vector<128x32xf32> to vector<8x16x32xf32>
    %c0_7 = arith.constant 0 : index
    %c0_8 = arith.constant 0 : index
    %7 = vector.load %arg4[%c0_7, %c0_8] : memref<32x32xf32, #tpu.memory_space<vmem>>, vector<32x32xf32>
    %cst_9 = arith.constant dense<0.000000e+00> : vector<128x32xf32>
    %8 = tpu.matmul %3, %7, %cst_9 {dimension_numbers = #tpu.dot_dimension_numbers<[1], [0], [0], [1], [0, 0, 1, 1], [], []>} : vector<128x32xf32>, vector<32x32xf32>, vector<128x32xf32> -> vector<128x32xf32>
    %9 = vector.shape_cast %8 : vector<128x32xf32> to vector<8x16x32xf32>
    %10 = vector.extract_strided_slice %6 {offsets = [0, 0, 0], sizes = [8, 8, 32], strides = [1, 1, 1]} : vector<8x16x32xf32> to vector<8x8x32xf32>
    %11 = vector.extract_strided_slice %6 {offsets = [0, 8, 0], sizes = [8, 8, 32], strides = [1, 1, 1]} : vector<8x16x32xf32> to vector<8x8x32xf32>
    %12 = vector.extract_strided_slice %9 {offsets = [0, 0, 0], sizes = [8, 8, 32], strides = [1, 1, 1]} : vector<8x16x32xf32> to vector<8x8x32xf32>
    %13 = vector.extract_strided_slice %9 {offsets = [0, 8, 0], sizes = [8, 8, 32], strides = [1, 1, 1]} : vector<8x16x32xf32> to vector<8x8x32xf32>
    "tpu.trace_start"() <{level = 10 : i32, message = "bnm,bmd->bnd"}> : () -> ()
    %cst_10 = arith.constant dense<0.000000e+00> : vector<8x8x32xf32>
    %14 = tpu.matmul %0, %11, %cst_10 {dimension_numbers = #tpu.dot_dimension_numbers<[2], [1], [1], [2], [0, 0, 0, 1, 1, 2], [0], [0]>} : vector<8x8x8xf32>, vector<8x8x32xf32>, vector<8x8x32xf32> -> vector<8x8x32xf32>
    "tpu.trace_stop"() : () -> ()
    "tpu.trace_start"() <{level = 10 : i32, message = "bmn,bnd->bmd"}> : () -> ()
    %cst_11 = arith.constant dense<0.000000e+00> : vector<8x8x32xf32>
    %15 = tpu.matmul %1, %10, %cst_11 {dimension_numbers = #tpu.dot_dimension_numbers<[2], [1], [1], [2], [0, 0, 0, 1, 1, 2], [0], [0]>} : vector<8x8x8xf32>, vector<8x8x32xf32>, vector<8x8x32xf32> -> vector<8x8x32xf32>
    "tpu.trace_stop"() : () -> ()
    %cst_12 = arith.constant dense<0.000000e+00> : vector<8x8xf32>
    %16 = vector.multi_reduction <add>, %0, %cst_12 [2] : vector<8x8x8xf32> to vector<8x8xf32>
    %17 = vector.shape_cast %16 : vector<8x8xf32> to vector<8x8x1xf32>
    %cst_13 = arith.constant dense<0.000000e+00> : vector<8x8xf32>
    %18 = vector.multi_reduction <add>, %1, %cst_13 [2] : vector<8x8x8xf32> to vector<8x8xf32>
    %19 = vector.shape_cast %18 : vector<8x8xf32> to vector<8x8x1xf32>
    %20 = arith.addf %12, %14 : vector<8x8x32xf32>
    %21 = vector.broadcast %17 : vector<8x8x1xf32> to vector<8x8x32xf32>
    %22 = arith.mulf %21, %10 : vector<8x8x32xf32>
    %23 = arith.subf %20, %22 : vector<8x8x32xf32>
    %c0_14 = arith.constant 0 : index
    %c0_15 = arith.constant 0 : index
    %c0_16 = arith.constant 0 : index
    %24 = vector.load %arg5[%c0_14, %c0_15, %c0_16] : memref<8x16x32xf32, #tpu.memory_space<vmem>>, vector<8x8x32xf32>
    tpu.vector_store %arg5[%c0_14, %c0_15, %c0_16], %23 {strides = array<i32>} : memref<8x16x32xf32, #tpu.memory_space<vmem>>, vector<8x8x32xf32>,
    %25 = arith.addf %13, %15 : vector<8x8x32xf32>
    %26 = vector.broadcast %19 : vector<8x8x1xf32> to vector<8x8x32xf32>
    %27 = arith.mulf %26, %11 : vector<8x8x32xf32>
    %28 = arith.subf %25, %27 : vector<8x8x32xf32>
    %c0_17 = arith.constant 0 : index
    %c8 = arith.constant 8 : index
    %c0_18 = arith.constant 0 : index
    %29 = vector.load %arg5[%c0_17, %c8, %c0_18] : memref<8x16x32xf32, #tpu.memory_space<vmem>>, vector<8x8x32xf32>
    tpu.vector_store %arg5[%c0_17, %c8, %c0_18], %28 {strides = array<i32>} : memref<8x16x32xf32, #tpu.memory_space<vmem>>, vector<8x8x32xf32>,
    return
  }
  func.func @transform_0(%arg0: i32) -> (i32, i32, i32) {
    %c0_i32 = arith.constant 0 : i32
    %c0_i32_0 = arith.constant 0 : i32
    %c0_i32_1 = arith.constant 0 : i32
    return %arg0, %c0_i32, %c0_i32_0 : i32, i32, i32
  }
  func.func @transform_1(%arg0: i32) -> (i32, i32, i32) {
    %c0_i32 = arith.constant 0 : i32
    %c0_i32_0 = arith.constant 0 : i32
    %c0_i32_1 = arith.constant 0 : i32
    return %arg0, %c0_i32, %c0_i32_0 : i32, i32, i32
  }
  func.func @transform_2(%arg0: i32) -> (i32, i32) {
    %c0_i32 = arith.constant 0 : i32
    %c0_i32_0 = arith.constant 0 : i32
    %c0_i32_1 = arith.constant 0 : i32
    return %c0_i32, %c0_i32_0 : i32, i32
  }
  func.func @transform_3(%arg0: i32) -> (i32, i32) {
    %c0_i32 = arith.constant 0 : i32
    %c0_i32_0 = arith.constant 0 : i32
    %c0_i32_1 = arith.constant 0 : i32
    return %c0_i32, %c0_i32_0 : i32, i32
  }
  func.func @transform_4(%arg0: i32) -> (i32, i32, i32) {
    %c0_i32 = arith.constant 0 : i32
    %c0_i32_0 = arith.constant 0 : i32
    %c0_i32_1 = arith.constant 0 : i32
    return %arg0, %c0_i32, %c0_i32_0 : i32, i32, i32
  }
}

</mosaic_0001>

<llo_original>
// kernel: tpu_custom_call.1
$region0: #{tpu_custom_call.1}
  #allocation0 [shape = 'u32[]', space=smem, size = 0x4, offset = 0x4, fixed_abs, tag = 'smem constant byte address 0x4 - core index']
  #allocation1 [shape = 'u32[144,128]{1,0:T(1,128)}', space=vmem, size = 0x12000, scoped, tag = 'internal scratch']
  %s0 = inlined_call_operand.vmem [shape: f32[16,8,8], index: 0, kind: input, shape index: {}]
  %s1 = inlined_call_operand.hbm [shape: f32[16,16,32], index: 1, kind: input, shape index: {}]
  %s2 = inlined_call_operand.vmem [shape: f32[32,32], index: 2, kind: input, shape index: {}]
  %s3 = inlined_call_operand.vmem [shape: f32[32,32], index: 3, kind: input, shape index: {}]
  %s4 = inlined_call_operand.hbm [shape: f32[16,16,32], index: 4, kind: output, shape index: {}]
  %s5 = sld [smem:[#allocation0]]
  $region53: #{tpu_custom_call.1} parent=0
    _
  %s7 = ssub.s32 1, %s5
  %s8 = scalar_select 0, %s7, %s5
  $region1: #{tpu_custom_call.1} parent=0
    #allocation2 [shape = 'u8[131072]{0}', space=vmem, size = 0x20000, scoped, tag = 'input window, operand 1']
    #allocation3 [shape = 's32[2]{0}', space=sflag, size = 0x8, scoped, tag = 'scoped memory for tpu_custom_call.1']
    #allocation4 [shape = 's32[2]{0}', space=sflag, size = 0x8, scoped, tag = 'scoped memory for tpu_custom_call.1']
    #allocation5 [shape = 'u8[131072]{0}', space=vmem, size = 0x20000, scoped, tag = 'output window, operand 0']
    %9 = vsyncpa [#allocation3], 0
    %s10 = scalar_lea.sflag [#allocation3], 1
    %11 = vsyncpa %s10, 0
    %12 = vsyncpa [#allocation4], 0
    %s13 = scalar_lea.sflag [#allocation4], 1
    %14 = vsyncpa %s13, 0
    loop: start=0, step=1, limit=4
    $region2: #{tpu_custom_call.1} parent=1 // loop_pre_header
      _
    $region3: #{tpu_custom_call.1} parent=1 // loop_header
      %s16 = sphi 0, %s20
      %p17 = scmp.ge.s32.totalorder %s16, 4
      %s26 = sphi 0, %s28
      %s29 = sphi 0, %s26
      %s30 = sphi 0, %s29
      %s46 = sphi 0, %s30
      %s52 = sphi 0, %s54
      %s55 = sphi 0, %s52
      %s56 = sphi 0, %s55
      %s72 = sphi 0, %s56
      %s76 = sphi 0, %s76
      %s78 = sphi 0, %s76
      %s79 = sphi 0, %s78
      %s93 = sphi 0, %s79
      %s97 = sphi 0, %s97
      %s99 = sphi 0, %s97
      %s100 = sphi 0, %s99
      %s114 = sphi 0, %s100
      %s120 = sphi 0, %s122
      %s123 = sphi 0, %s120
      %s124 = sphi 0, %s123
      %s140 = sphi 0, %s124
    $region4: #{tpu_custom_call.1} parent=1 // loop_header_branch
      %19 = sbr.rel (%p17) target = $region8
    $region5: #{tpu_custom_call.1} parent=1 // loop_body
      %s21 = ssub.s32 %s16, 1
      %s22 = ssub.s32 %s16, 2
      %s23 = sadd.s32 %s16, 1
      %s24 = ssub.s32 %s16, %s23
      %p25 = scmp.eq.s32.totalorder %s24, 0
      %s27 = sadd.s32 %s26, 1
      %s28 = scalar_select %p25, %s26, %s27
      %p31 = pneg %p25
      %p32 = scmp.eq.s32.totalorder %s16, 1
      %p33 = por %p31, %p32
      %p34 = scmp.ne.s32.totalorder %s26, %s29
      %p35 = scmp.eq.s32.totalorder %s16, 0
      %p36 = por %p34, %p35
      %p37 = scmp.ne.s32.totalorder %s26, %s29
      %p38 = scmp.eq.s32.totalorder %s21, 1
      %p39 = por %p37, %p38
      %p40 = scmp.ne.s32.totalorder %s29, %s30
      %p41 = scmp.eq.s32.totalorder %s21, 0
      %p42 = por %p40, %p41
      %p43 = scmp.ne.s32.totalorder %s29, %s30
      %p44 = scmp.eq.s32.totalorder %s22, 1
      %p45 = por %p43, %p44
      %p47 = scmp.ne.s32.totalorder %s30, %s46
      %p48 = scmp.eq.s32.totalorder %s22, 0
      %p49 = por %p47, %p48
      %s50 = ssub.s32 %s16, %s23
      %p51 = scmp.eq.s32.totalorder %s50, 0
      %s53 = sadd.s32 %s52, 1
      %s54 = scalar_select %p51, %s52, %s53
      %p57 = pneg %p51
      %p58 = scmp.eq.s32.totalorder %s16, 1
      %p59 = por %p57, %p58
      %p60 = scmp.ne.s32.totalorder %s52, %s55
      %p61 = scmp.eq.s32.totalorder %s16, 0
      %p62 = por %p60, %p61
      %p63 = scmp.ne.s32.totalorder %s52, %s55
      %p64 = scmp.eq.s32.totalorder %s21, 1
      %p65 = por %p63, %p64
      %p66 = scmp.ne.s32.totalorder %s55, %s56
      %p67 = scmp.eq.s32.totalorder %s21, 0
      %p68 = por %p66, %p67
      %p69 = scmp.ne.s32.totalorder %s55, %s56
      %p70 = scmp.eq.s32.totalorder %s22, 1
      %p71 = por %p69, %p70
      %p73 = scmp.ne.s32.totalorder %s56, %s72
      %p74 = scmp.eq.s32.totalorder %s22, 0
      %p75 = por %p73, %p74
      %s77 = sadd.s32 %s76, 1
      %p80 = scmp.eq.s32.totalorder %s16, 1
      %p81 = scmp.ne.s32.totalorder %s76, %s78
      %p82 = scmp.eq.s32.totalorder %s16, 0
      %p83 = por %p81, %p82
      %p84 = scmp.ne.s32.totalorder %s76, %s78
      %p85 = scmp.eq.s32.totalorder %s21, 1
      %p86 = por %p84, %p85
      %p87 = scmp.ne.s32.totalorder %s78, %s79
      %p88 = scmp.eq.s32.totalorder %s21, 0
      %p89 = por %p87, %p88
      %p90 = scmp.ne.s32.totalorder %s78, %s79
      %p91 = scmp.eq.s32.totalorder %s22, 1
      %p92 = por %p90, %p91
      %p94 = scmp.ne.s32.totalorder %s79, %s93
      %p95 = scmp.eq.s32.totalorder %s22, 0
      %p96 = por %p94, %p95
      %s98 = sadd.s32 %s97, 1
      %p101 = scmp.eq.s32.totalorder %s16, 1
      %p102 = scmp.ne.s32.totalorder %s97, %s99
      %p103 = scmp.eq.s32.totalorder %s16, 0
      %p104 = por %p102, %p103
      %p105 = scmp.ne.s32.totalorder %s97, %s99
      %p106 = scmp.eq.s32.totalorder %s21, 1
      %p107 = por %p105, %p106
      %p108 = scmp.ne.s32.totalorder %s99, %s100
      %p109 = scmp.eq.s32.totalorder %s21, 0
      %p110 = por %p108, %p109
      %p111 = scmp.ne.s32.totalorder %s99, %s100
      %p112 = scmp.eq.s32.totalorder %s22, 1
      %p113 = por %p111, %p112
      %p115 = scmp.ne.s32.totalorder %s100, %s114
      %p116 = scmp.eq.s32.totalorder %s22, 0
      %p117 = por %p115, %p116
      %s118 = ssub.s32 %s16, %s23
      %p119 = scmp.eq.s32.totalorder %s118, 0
      %s121 = sadd.s32 %s120, 1
      %s122 = scalar_select %p119, %s120, %s121
      %p125 = pneg %p119
      %p126 = scmp.eq.s32.totalorder %s16, 1
      %p127 = por %p125, %p126
      %p128 = scmp.ne.s32.totalorder %s120, %s123
      %p129 = scmp.eq.s32.totalorder %s16, 0
      %p130 = por %p128, %p129
      %p131 = scmp.ne.s32.totalorder %s120, %s123
      %p132 = scmp.eq.s32.totalorder %s21, 1
      %p133 = por %p131, %p132
      %p134 = scmp.ne.s32.totalorder %s123, %s124
      %p135 = scmp.eq.s32.totalorder %s21, 0
      %p136 = por %p134, %p135
      %p137 = scmp.ne.s32.totalorder %s123, %s124
      %p138 = scmp.eq.s32.totalorder %s22, 1
      %p139 = por %p137, %p138
      %p141 = scmp.ne.s32.totalorder %s124, %s140
      %p142 = scmp.eq.s32.totalorder %s22, 0
      %p143 = por %p141, %p142
      %p144 = scmp.le.s32.totalorder 1, %s16
      %p145 = scmp.lt.s32.totalorder %s16, 3
      %p146 = pnand %p144, %p145
      %p147 = pneg %p146
      // Predicated region
      $region9: #{tpu_custom_call.1} parent=5 // pred_check
        _
      $region10: #{tpu_custom_call.1} parent=5 // pred_check_branch
        %149 = sbr.rel (%p146) target = $region12
      $region11: #{tpu_custom_call.1} parent=5 // pred_region
        %s150 = ssub.s32 %s16, 1
        // Predicated region
        $region13: #{tpu_custom_call.1} parent=11 // pred_check
          %p151 = pneg %p89
        $region14: #{tpu_custom_call.1} parent=11 // pred_check_branch
          %153 = sbr.rel (%p151) target = $region16
        $region15: #{tpu_custom_call.1} parent=11 // pred_region
          _
        $region16: #{tpu_custom_call.1} parent=11 // pred_fallthru
          _
        // Predicated region
        $region17: #{tpu_custom_call.1} parent=11 // pred_check
          %p154 = pneg %p110
        $region18: #{tpu_custom_call.1} parent=11 // pred_check_branch
          %156 = sbr.rel (%p154) target = $region20
        $region19: #{tpu_custom_call.1} parent=11 // pred_region
          _
        $region20: #{tpu_custom_call.1} parent=11 // pred_fallthru
          _
      $region12: #{tpu_custom_call.1} parent=5 // pred_fallthru
        _
      %p157 = scmp.lt.s32.totalorder %s16, 2
      // Predicated region
      $region21: #{tpu_custom_call.1} parent=5 // pred_check
        %p158 = pneg %p157
      $region22: #{tpu_custom_call.1} parent=5 // pred_check_branch
        %160 = sbr.rel (%p158) target = $region24
      $region23: #{tpu_custom_call.1} parent=5 // pred_region
        // Predicated region
        $region25: #{tpu_custom_call.1} parent=23 // pred_check
          %p161 = pneg %p36
        $region26: #{tpu_custom_call.1} parent=23 // pred_check_branch
          %163 = sbr.rel (%p161) target = $region28
        $region27: #{tpu_custom_call.1} parent=23 // pred_region
          %s164 = smul.u32 8, %s16
          %p165 = scmp.lt.s32.totalorder %s164, 15
          %s166 = scalar_select %p165, %s164, 15
          %s167 = smul.addr %s166, 8
          %s168 = scalar_lea.vmem %s0, %s167
          %s169 = smul.u32 8, %s16
        $region28: #{tpu_custom_call.1} parent=23 // pred_fallthru
          _
        // Predicated region
        $region29: #{tpu_custom_call.1} parent=23 // pred_check
          %p170 = pneg %p62
        $region30: #{tpu_custom_call.1} parent=23 // pred_check_branch
          %172 = sbr.rel (%p170) target = $region32
        $region31: #{tpu_custom_call.1} parent=23 // pred_region
          %s173 = sand.u32 %s52, 1
          %s174 = scalar_lea.sflag [#allocation3], %s173
          %s175 = sand.u32 %s52, 1
          %s176 = smul.addr %s175, 128
          %s177 = scalar_lea.vmem [#allocation2], %s176
          %s178 = smul.u32 8, %s16
          %s180 = ssub.s32 2048, 2048
          %181 = vsyncadd %s174, %s180
          %s182 = smul.addr %s178, 2
          %s183 = smul.addr %s182, 128
          %s184 = scalar_lea.hbm %s1, %s183
          %s185 = sshll.u32 %s177, 4
          %s186 = int_to_ptr.vmem [resolvable:$true] %s185
          %191 = dma.hbm_to_vmem [thread:$0]  %s184, 2048, %s186, %s174, 128, 128, 8
        $region32: #{tpu_custom_call.1} parent=23 // pred_fallthru
          _
      $region24: #{tpu_custom_call.1} parent=5 // pred_fallthru
        _
      %p192 = scmp.le.s32.totalorder 1, %s16
      %p193 = scmp.lt.s32.totalorder %s16, 3
      %p194 = pnand %p192, %p193
      %p195 = pneg %p194
      // Predicated region
      $region33: #{tpu_custom_call.1} parent=5 // pred_check
        _
      $region34: #{tpu_custom_call.1} parent=5 // pred_check_branch
        %197 = sbr.rel (%p194) target = $region36
      $region35: #{tpu_custom_call.1} parent=5 // pred_region
        %s198 = ssub.s32 %s16, 1
        %s199 = sand.u32 %s55, 1
        %s200 = scalar_lea.sflag [#allocation3], %s199
        %s201 = sand.u32 %s55, 1
        %s202 = smul.addr %s201, 128
        %s203 = scalar_lea.vmem [#allocation2], %s202
        // Predicated region
        $region37: #{tpu_custom_call.1} parent=35 // pred_check
          %p204 = pneg %p68
        $region38: #{tpu_custom_call.1} parent=35 // pred_check_branch
          %206 = sbr.rel (%p204) target = $region40
        $region39: #{tpu_custom_call.1} parent=35 // pred_region
          %207 = dma.done %s200, 2048
        $region40: #{tpu_custom_call.1} parent=35 // pred_fallthru
          _
        %s208 = smul.u32 8, %s21
        %p209 = scmp.lt.s32.totalorder %s208, 15
        %s210 = scalar_select %p209, %s208, 15
        %s211 = smul.addr %s210, 8
        %s212 = scalar_lea.vmem %s0, %s211
        %p213 = pneg %p42
        %p214 = pneg %p39
        %s215 = sand.u32 %s55, 1
        %s216 = scalar_lea.sflag [#allocation3], %s215
        %s217 = sand.u32 %s55, 1
        %s218 = smul.addr %s217, 128
        %s219 = scalar_lea.vmem [#allocation2], %s218
        %p220 = pneg %p68
        %p221 = pneg %p65
        %p222 = pneg %p89
        %p223 = pneg %p86
        %p224 = pneg %p110
        %p225 = pneg %p107
        %p226 = pneg %p136
        %p227 = pneg %p133
        %s228 = sand.u32 %s123, 1
        %s229 = scalar_lea.sflag [#allocation4], %s228
        %s230 = sand.u32 %s123, 1
        %s231 = smul.addr %s230, 128
        %s232 = scalar_lea.vmem [#allocation5], %s231
        %s233 = smul.u32 8, %s21
        %p234 = scmp.lt.s32.totalorder %s233, 15
        %s235 = scalar_select %p234, %s233, 15
        %s236 = smul.addr %s235, 8
        %s237 = scalar_lea.vmem %s0, %s236
        %s238 = smul.u32 8, %s21
        %s239 = smul.u32 8, %s21
        %s240 = smul.u32 8, %s21
        %v241 = vld [vmem:[%s237] sm:$0xff]
        %v242 = vld [vmem:[%s237 + $0x8] sm:$0xff]
        %v243 = vld [vmem:[%s237 + $0x10] sm:$0xff]
        %v244 = vld [vmem:[%s237 + $0x18] sm:$0xff]
        %v245 = vld [vmem:[%s237 + $0x20] sm:$0xff]
        %v246 = vld [vmem:[%s237 + $0x28] sm:$0xff]
        %v247 = vld [vmem:[%s237 + $0x30] sm:$0xff]
        %v248 = vld [vmem:[%s237 + $0x38] sm:$0xff]
        %249 = vxpose.xlu0.b32.start [1/16] %v241, 128
        %250 = vxpose.xlu0.b32.cont [2/16] 0.0, 128
        %251 = vxpose.xlu0.b32.cont [3/16] 0.0, 128
        %252 = vxpose.xlu0.b32.cont [4/16] 0.0, 128
        %253 = vxpose.xlu0.b32.cont [5/16] 0.0, 128
        %254 = vxpose.xlu0.b32.cont [6/16] 0.0, 128
        %255 = vxpose.xlu0.b32.cont [7/16] 0.0, 128
        %256 = vxpose.xlu0.b32.cont [8/16] 0.0, 128
        %257 = vxpose.xlu0.b32.cont [9/16] 0.0, 128
        %258 = vxpose.xlu0.b32.cont [10/16] 0.0, 128
        %259 = vxpose.xlu0.b32.cont [11/16] 0.0, 128
        %260 = vxpose.xlu0.b32.cont [12/16] 0.0, 128
        %261 = vxpose.xlu0.b32.cont [13/16] 0.0, 128
        %262 = vxpose.xlu0.b32.cont [14/16] 0.0, 128
        %263 = vxpose.xlu0.b32.cont [15/16] 0.0, 128
        %264 = vxpose.xlu0.b32.end [16/16] 0.0, 128
        %v265 = vpop.trf.xlu0
        %v266 = vpop.trf.xlu0
        %v267 = vpop.trf.xlu0
        %v268 = vpop.trf.xlu0
        %v269 = vpop.trf.xlu0
        %v270 = vpop.trf.xlu0
        %v271 = vpop.trf.xlu0
        %v272 = vpop.trf.xlu0
        %v273 = vpop.trf.xlu0
        %v274 = vpop.trf.xlu0
        %v275 = vpop.trf.xlu0
        %v276 = vpop.trf.xlu0
        %v277 = vpop.trf.xlu0
        %v278 = vpop.trf.xlu0
        %v279 = vpop.trf.xlu0
        %v280 = vpop.trf.xlu0
        %281 = vxpose.xlu0.b32.start [1/16] %v242, 128
        %282 = vxpose.xlu0.b32.cont [2/16] 0.0, 128
        %283 = vxpose.xlu0.b32.cont [3/16] 0.0, 128
        %284 = vxpose.xlu0.b32.cont [4/16] 0.0, 128
        %285 = vxpose.xlu0.b32.cont [5/16] 0.0, 128
        %286 = vxpose.xlu0.b32.cont [6/16] 0.0, 128
        %287 = vxpose.xlu0.b32.cont [7/16] 0.0, 128
        %288 = vxpose.xlu0.b32.cont [8/16] 0.0, 128
        %289 = vxpose.xlu0.b32.cont [9/16] 0.0, 128
        %290 = vxpose.xlu0.b32.cont [10/16] 0.0, 128
        %291 = vxpose.xlu0.b32.cont [11/16] 0.0, 128
        %292 = vxpose.xlu0.b32.cont [12/16] 0.0, 128
        %293 = vxpose.xlu0.b32.cont [13/16] 0.0, 128
        %294 = vxpose.xlu0.b32.cont [14/16] 0.0, 128
        %295 = vxpose.xlu0.b32.cont [15/16] 0.0, 128
        %296 = vxpose.xlu0.b32.end [16/16] 0.0, 128
        %v297 = vpop.trf.xlu0
        %v298 = vpop.trf.xlu0
        %v299 = vpop.trf.xlu0
        %v300 = vpop.trf.xlu0
        %v301 = vpop.trf.xlu0
        %v302 = vpop.trf.xlu0
        %v303 = vpop.trf.xlu0
        %v304 = vpop.trf.xlu0
        %v305 = vpop.trf.xlu0
        %v306 = vpop.trf.xlu0
        %v307 = vpop.trf.xlu0
        %v308 = vpop.trf.xlu0
        %v309 = vpop.trf.xlu0
        %v310 = vpop.trf.xlu0
        %v311 = vpop.trf.xlu0
        %v312 = vpop.trf.xlu0
        %313 = vxpose.xlu0.b32.start [1/16] %v243, 128
        %314 = vxpose.xlu0.b32.cont [2/16] 0.0, 128
        %315 = vxpose.xlu0.b32.cont [3/16] 0.0, 128
        %316 = vxpose.xlu0.b32.cont [4/16] 0.0, 128
        %317 = vxpose.xlu0.b32.cont [5/16] 0.0, 128
        %318 = vxpose.xlu0.b32.cont [6/16] 0.0, 128
        %319 = vxpose.xlu0.b32.cont [7/16] 0.0, 128
        %320 = vxpose.xlu0.b32.cont [8/16] 0.0, 128
        %321 = vxpose.xlu0.b32.cont [9/16] 0.0, 128
        %322 = vxpose.xlu0.b32.cont [10/16] 0.0, 128
        %323 = vxpose.xlu0.b32.cont [11/16] 0.0, 128
        %324 = vxpose.xlu0.b32.cont [12/16] 0.0, 128
        %325 = vxpose.xlu0.b32.cont [13/16] 0.0, 128
        %326 = vxpose.xlu0.b32.cont [14/16] 0.0, 128
        %327 = vxpose.xlu0.b32.cont [15/16] 0.0, 128
        %328 = vxpose.xlu0.b32.end [16/16] 0.0, 128
        %v329 = vpop.trf.xlu0
        %v330 = vpop.trf.xlu0
        %v331 = vpop.trf.xlu0
        %v332 = vpop.trf.xlu0
        %v333 = vpop.trf.xlu0
        %v334 = vpop.trf.xlu0
        %v335 = vpop.trf.xlu0
        %v336 = vpop.trf.xlu0
        %v337 = vpop.trf.xlu0
        %v338 = vpop.trf.xlu0
        %v339 = vpop.trf.xlu0
        %v340 = vpop.trf.xlu0
        %v341 = vpop.trf.xlu0
        %v342 = vpop.trf.xlu0
        %v343 = vpop.trf.xlu0
        %v344 = vpop.trf.xlu0
        %345 = vxpose.xlu0.b32.start [1/16] %v244, 128
        %346 = vxpose.xlu0.b32.cont [2/16] 0.0, 128
        %347 = vxpose.xlu0.b32.cont [3/16] 0.0, 128
        %348 = vxpose.xlu0.b32.cont [4/16] 0.0, 128
        %349 = vxpose.xlu0.b32.cont [5/16] 0.0, 128
        %350 = vxpose.xlu0.b32.cont [6/16] 0.0, 128
        %351 = vxpose.xlu0.b32.cont [7/16] 0.0, 128
        %352 = vxpose.xlu0.b32.cont [8/16] 0.0, 128
        %353 = vxpose.xlu0.b32.cont [9/16] 0.0, 128
        %354 = vxpose.xlu0.b32.cont [10/16] 0.0, 128
        %355 = vxpose.xlu0.b32.cont [11/16] 0.0, 128
        %356 = vxpose.xlu0.b32.cont [12/16] 0.0, 128
        %357 = vxpose.xlu0.b32.cont [13/16] 0.0, 128
        %358 = vxpose.xlu0.b32.cont [14/16] 0.0, 128
        %359 = vxpose.xlu0.b32.cont [15/16] 0.0, 128
        %360 = vxpose.xlu0.b32.end [16/16] 0.0, 128
        %v361 = vpop.trf.xlu0
        %v362 = vpop.trf.xlu0
        %v363 = vpop.trf.xlu0
        %v364 = vpop.trf.xlu0
        %v365 = vpop.trf.xlu0
        %v366 = vpop.trf.xlu0
        %v367 = vpop.trf.xlu0
        %v368 = vpop.trf.xlu0
        %v369 = vpop.trf.xlu0
        %v370 = vpop.trf.xlu0
        %v371 = vpop.trf.xlu0
        %v372 = vpop.trf.xlu0
        %v373 = vpop.trf.xlu0
        %v374 = vpop.trf.xlu0
        %v375 = vpop.trf.xlu0
        %v376 = vpop.trf.xlu0
        %377 = vxpose.xlu0.b32.start [1/16] %v245, 128
        %378 = vxpose.xlu0.b32.cont [2/16] 0.0, 128
        %379 = vxpose.xlu0.b32.cont [3/16] 0.0, 128
        %380 = vxpose.xlu0.b32.cont [4/16] 0.0, 128
        %381 = vxpose.xlu0.b32.cont [5/16] 0.0, 128
        %382 = vxpose.xlu0.b32.cont [6/16] 0.0, 128
        %383 = vxpose.xlu0.b32.cont [7/16] 0.0, 128
        %384 = vxpose.xlu0.b32.cont [8/16] 0.0, 128
        %385 = vxpose.xlu0.b32.cont [9/16] 0.0, 128
        %386 = vxpose.xlu0.b32.cont [10/16] 0.0, 128
        %387 = vxpose.xlu0.b32.cont [11/16] 0.0, 128
        %388 = vxpose.xlu0.b32.cont [12/16] 0.0, 128
        %389 = vxpose.xlu0.b32.cont [13/16] 0.0, 128
        %390 = vxpose.xlu0.b32.cont [14/16] 0.0, 128
        %391 = vxpose.xlu0.b32.cont [15/16] 0.0, 128
        %392 = vxpose.xlu0.b32.end [16/16] 0.0, 128
        %v393 = vpop.trf.xlu0
        %v394 = vpop.trf.xlu0
        %v395 = vpop.trf.xlu0
        %v396 = vpop.trf.xlu0
        %v397 = vpop.trf.xlu0
        %v398 = vpop.trf.xlu0
        %v399 = vpop.trf.xlu0
        %v400 = vpop.trf.xlu0
        %v401 = vpop.trf.xlu0
        %v402 = vpop.trf.xlu0
        %v403 = vpop.trf.xlu0
        %v404 = vpop.trf.xlu0
        %v405 = vpop.trf.xlu0
        %v406 = vpop.trf.xlu0
        %v407 = vpop.trf.xlu0
        %v408 = vpop.trf.xlu0
        %409 = vxpose.xlu0.b32.start [1/16] %v246, 128
        %410 = vxpose.xlu0.b32.cont [2/16] 0.0, 128
        %411 = vxpose.xlu0.b32.cont [3/16] 0.0, 128
        %412 = vxpose.xlu0.b32.cont [4/16] 0.0, 128
        %413 = vxpose.xlu0.b32.cont [5/16] 0.0, 128
        %414 = vxpose.xlu0.b32.cont [6/16] 0.0, 128
        %415 = vxpose.xlu0.b32.cont [7/16] 0.0, 128
        %416 = vxpose.xlu0.b32.cont [8/16] 0.0, 128
        %417 = vxpose.xlu0.b32.cont [9/16] 0.0, 128
        %418 = vxpose.xlu0.b32.cont [10/16] 0.0, 128
        %419 = vxpose.xlu0.b32.cont [11/16] 0.0, 128
        %420 = vxpose.xlu0.b32.cont [12/16] 0.0, 128
        %421 = vxpose.xlu0.b32.cont [13/16] 0.0, 128
        %422 = vxpose.xlu0.b32.cont [14/16] 0.0, 128
        %423 = vxpose.xlu0.b32.cont [15/16] 0.0, 128
        %424 = vxpose.xlu0.b32.end [16/16] 0.0, 128
        %v425 = vpop.trf.xlu0
        %v426 = vpop.trf.xlu0
        %v427 = vpop.trf.xlu0
        %v428 = vpop.trf.xlu0
        %v429 = vpop.trf.xlu0
        %v430 = vpop.trf.xlu0
        %v431 = vpop.trf.xlu0
        %v432 = vpop.trf.xlu0
        %v433 = vpop.trf.xlu0
        %v434 = vpop.trf.xlu0
        %v435 = vpop.trf.xlu0
        %v436 = vpop.trf.xlu0
        %v437 = vpop.trf.xlu0
        %v438 = vpop.trf.xlu0
        %v439 = vpop.trf.xlu0
        %v440 = vpop.trf.xlu0
        %441 = vxpose.xlu0.b32.start [1/16] %v247, 128
        %442 = vxpose.xlu0.b32.cont [2/16] 0.0, 128
        %443 = vxpose.xlu0.b32.cont [3/16] 0.0, 128
        %444 = vxpose.xlu0.b32.cont [4/16] 0.0, 128
        %445 = vxpose.xlu0.b32.cont [5/16] 0.0, 128
        %446 = vxpose.xlu0.b32.cont [6/16] 0.0, 128
        %447 = vxpose.xlu0.b32.cont [7/16] 0.0, 128
        %448 = vxpose.xlu0.b32.cont [8/16] 0.0, 128
        %449 = vxpose.xlu0.b32.cont [9/16] 0.0, 128
        %450 = vxpose.xlu0.b32.cont [10/16] 0.0, 128
        %451 = vxpose.xlu0.b32.cont [11/16] 0.0, 128
        %452 = vxpose.xlu0.b32.cont [12/16] 0.0, 128
        %453 = vxpose.xlu0.b32.cont [13/16] 0.0, 128
        %454 = vxpose.xlu0.b32.cont [14/16] 0.0, 128
        %455 = vxpose.xlu0.b32.cont [15/16] 0.0, 128
        %456 = vxpose.xlu0.b32.end [16/16] 0.0, 128
        %v457 = vpop.trf.xlu0
        %v458 = vpop.trf.xlu0
        %v459 = vpop.trf.xlu0
        %v460 = vpop.trf.xlu0
        %v461 = vpop.trf.xlu0
        %v462 = vpop.trf.xlu0
        %v463 = vpop.trf.xlu0
        %v464 = vpop.trf.xlu0
        %v465 = vpop.trf.xlu0
        %v466 = vpop.trf.xlu0
        %v467 = vpop.trf.xlu0
        %v468 = vpop.trf.xlu0
        %v469 = vpop.trf.xlu0
        %v470 = vpop.trf.xlu0
        %v471 = vpop.trf.xlu0
        %v472 = vpop.trf.xlu0
        %473 = vxpose.xlu0.b32.start [1/16] %v248, 128
        %474 = vxpose.xlu0.b32.cont [2/16] 0.0, 128
        %475 = vxpose.xlu0.b32.cont [3/16] 0.0, 128
        %476 = vxpose.xlu0.b32.cont [4/16] 0.0, 128
        %477 = vxpose.xlu0.b32.cont [5/16] 0.0, 128
        %478 = vxpose.xlu0.b32.cont [6/16] 0.0, 128
        %479 = vxpose.xlu0.b32.cont [7/16] 0.0, 128
        %480 = vxpose.xlu0.b32.cont [8/16] 0.0, 128
        %481 = vxpose.xlu0.b32.cont [9/16] 0.0, 128
        %482 = vxpose.xlu0.b32.cont [10/16] 0.0, 128
        %483 = vxpose.xlu0.b32.cont [11/16] 0.0, 128
        %484 = vxpose.xlu0.b32.cont [12/16] 0.0, 128
        %485 = vxpose.xlu0.b32.cont [13/16] 0.0, 128
        %486 = vxpose.xlu0.b32.cont [14/16] 0.0, 128
        %487 = vxpose.xlu0.b32.cont [15/16] 0.0, 128
        %488 = vxpose.xlu0.b32.end [16/16] 0.0, 128
        %v489 = vpop.trf.xlu0
        %v490 = vpop.trf.xlu0
        %v491 = vpop.trf.xlu0
        %v492 = vpop.trf.xlu0
        %v493 = vpop.trf.xlu0
        %v494 = vpop.trf.xlu0
        %v495 = vpop.trf.xlu0
        %v496 = vpop.trf.xlu0
        %v497 = vpop.trf.xlu0
        %v498 = vpop.trf.xlu0
        %v499 = vpop.trf.xlu0
        %v500 = vpop.trf.xlu0
        %v501 = vpop.trf.xlu0
        %v502 = vpop.trf.xlu0
        %v503 = vpop.trf.xlu0
        %v504 = vpop.trf.xlu0
        %v505 = vld [vmem:[%s203] sm:$0xff]
        %v506 = vld [vmem:[%s203 + $0x8] sm:$0xff]
        %v507 = vld [vmem:[%s203 + $0x10] sm:$0xff]
        %v508 = vld [vmem:[%s203 + $0x18] sm:$0xff]
        %v509 = vld [vmem:[%s203 + $0x20] sm:$0xff]
        %v510 = vld [vmem:[%s203 + $0x28] sm:$0xff]
        %v511 = vld [vmem:[%s203 + $0x30] sm:$0xff]
        %v512 = vld [vmem:[%s203 + $0x38] sm:$0xff]
        %v513 = vld [vmem:[%s203 + $0x40] sm:$0xff]
        %v514 = vld [vmem:[%s203 + $0x48] sm:$0xff]
        %v515 = vld [vmem:[%s203 + $0x50] sm:$0xff]
        %v516 = vld [vmem:[%s203 + $0x58] sm:$0xff]
        %v517 = vld [vmem:[%s203 + $0x60] sm:$0xff]
        %v518 = vld [vmem:[%s203 + $0x68] sm:$0xff]
        %v519 = vld [vmem:[%s203 + $0x70] sm:$0xff]
        %v520 = vld [vmem:[%s203 + $0x78] sm:$0xff]
        %v521 = vld [vmem:[%s2] sm:$0xff]
        %v522 = vld [vmem:[%s2 + $0x8] sm:$0xff]
        %v523 = vld [vmem:[%s2 + $0x10] sm:$0xff]
        %v524 = vld [vmem:[%s2 + $0x18] sm:$0xff]
        %vm525 = vcmask 261120
        %v527 = vsel %vm525, %v505, 0
        %v530 = vsel %vm525, %v506, 0
        %v533 = vsel %vm525, %v507, 0
        %v536 = vsel %vm525, %v508, 0
        %v539 = vsel %vm525, %v509, 0
        %v542 = vsel %vm525, %v510, 0
        %v545 = vsel %vm525, %v511, 0
        %v548 = vsel %vm525, %v512, 0
        %v551 = vsel %vm525, %v513, 0
        %v554 = vsel %vm525, %v514, 0
        %v557 = vsel %vm525, %v515, 0
        %v560 = vsel %vm525, %v516, 0
        %v563 = vsel %vm525, %v517, 0
        %v566 = vsel %vm525, %v518, 0
        %v569 = vsel %vm525, %v519, 0
        %v572 = vsel %vm525, %v520, 0
        %574 = vmatprep.subr.mxu0 0.0
        %575 = vmatpush1.msra.mxu0 %v521
        %576 = vmatprep.subr.mxu0 0.0
        %577 = vmatpush1.msra.mxu0 %v522
        %578 = vmatprep.subr.mxu0 0.0
        %579 = vmatpush1.msra.mxu0 %v523
        %580 = vmatprep.subr.mxu0 0.0
        %581 = vmatpush1.msra.mxu0 %v524
        %582 = vmatprep.subr.mxu0 0.0
        %583 = vmatpush1.msra.mxu0 0.0
        %584 = vmatprep.subr.mxu0 0.0
        %585 = vmatpush1.msra.mxu0 0.0
        %586 = vmatprep.subr.mxu0 0.0
        %587 = vmatpush1.msra.mxu0 0.0
        %588 = vmatprep.subr.mxu0 0.0
        %589 = vmatpush1.msra.mxu0 0.0
        %590 = vmatprep.subr.mxu0 0.0
        %591 = vmatpush1.msra.mxu0 0.0
        %592 = vmatprep.subr.mxu0 0.0
        %593 = vmatpush1.msra.mxu0 0.0
        %594 = vmatprep.subr.mxu0 0.0
        %595 = vmatpush1.msra.mxu0 0.0
        %596 = vmatprep.subr.mxu0 0.0
        %597 = vmatpush1.msra.mxu0 0.0
        %598 = vmatprep.subr.mxu0 0.0
        %599 = vmatpush1.msra.mxu0 0.0
        %600 = vmatprep.subr.mxu0 0.0
        %601 = vmatpush1.msra.mxu0 0.0
        %602 = vmatprep.subr.mxu0 0.0
        %603 = vmatpush1.msra.mxu0 0.0
        %604 = vmatprep.subr.mxu0 0.0
        %605 = vmatpush1.msra.mxu0 0.0
        %606 = vmatprep.subr.mxu0 0.0
        %607 = vmatpush1.msra.mxu0 0.0
        %608 = vmatprep.subr.mxu0 0.0
        %609 = vmatpush1.msra.mxu0 0.0
        %610 = vmatprep.subr.mxu0 0.0
        %611 = vmatpush1.msra.mxu0 0.0
        %612 = vmatprep.subr.mxu0 0.0
        %613 = vmatpush1.msra.mxu0 0.0
        %614 = vmatprep.subr.mxu0 0.0
        %615 = vmatpush1.msra.mxu0 0.0
        %616 = vmatprep.subr.mxu0 0.0
        %617 = vmatpush1.msra.mxu0 0.0
        %618 = vmatprep.subr.mxu0 0.0
        %619 = vmatpush1.msra.mxu0 0.0
        %620 = vmatprep.subr.mxu0 0.0
        %621 = vmatpush1.msra.mxu0 0.0
        %622 = vmatprep.subr.mxu0 0.0
        %623 = vmatpush1.msra.mxu0 0.0
        %624 = vmatprep.subr.mxu0 0.0
        %625 = vmatpush1.msra.mxu0 0.0
        %626 = vmatprep.subr.mxu0 0.0
        %627 = vmatpush1.msra.mxu0 0.0
        %628 = vmatprep.subr.mxu0 0.0
        %629 = vmatpush1.msra.mxu0 0.0
        %630 = vmatprep.subr.mxu0 0.0
        %631 = vmatpush1.msra.mxu0 0.0
        %632 = vmatprep.subr.mxu0 0.0
        %633 = vmatpush1.msra.mxu0 0.0
        %634 = vmatprep.subr.mxu0 0.0
        %635 = vmatpush1.msra.mxu0 0.0
        %636 = vmatprep.subr.mxu0 0.0
        %637 = vmatpush1.msra.mxu0 0.0
        %638 = vmatprep.mubr.f32.mxu0 0.0
        %639 = vmatmul.mubr.f32.gmra.mrb[0].mxu0 %v527
        %v640 = vpop.f32.mrb[0].mxu0
        %v641 = vadd.f32 0.0, %v640
        %v642 = vpop.f32.mrb[0].mxu0
        %643 = vmatprep.mubr.f32.mxu0 0.0
        %644 = vmatmul.mubr.f32.gmra.mrb[0].mxu0 %v530
        %v645 = vpop.f32.mrb[0].mxu0
        %v646 = vadd.f32 0.0, %v645
        %v647 = vpop.f32.mrb[0].mxu0
        %648 = vmatprep.mubr.f32.mxu0 0.0
        %649 = vmatmul.mubr.f32.gmra.mrb[0].mxu0 %v533
        %v650 = vpop.f32.mrb[0].mxu0
        %v651 = vadd.f32 0.0, %v650
        %v652 = vpop.f32.mrb[0].mxu0
        %653 = vmatprep.mubr.f32.mxu0 0.0
        %654 = vmatmul.mubr.f32.gmra.mrb[0].mxu0 %v536
        %v655 = vpop.f32.mrb[0].mxu0
        %v656 = vadd.f32 0.0, %v655
        %v657 = vpop.f32.mrb[0].mxu0
        %658 = vmatprep.mubr.f32.mxu0 0.0
        %659 = vmatmul.mubr.f32.gmra.mrb[0].mxu0 %v539
        %v660 = vpop.f32.mrb[0].mxu0
        %v661 = vadd.f32 0.0, %v660
        %v662 = vpop.f32.mrb[0].mxu0
        %663 = vmatprep.mubr.f32.mxu0 0.0
        %664 = vmatmul.mubr.f32.gmra.mrb[0].mxu0 %v542
        %v665 = vpop.f32.mrb[0].mxu0
        %v666 = vadd.f32 0.0, %v665
        %v667 = vpop.f32.mrb[0].mxu0
        %668 = vmatprep.mubr.f32.mxu0 0.0
        %669 = vmatmul.mubr.f32.gmra.mrb[0].mxu0 %v545
        %v670 = vpop.f32.mrb[0].mxu0
        %v671 = vadd.f32 0.0, %v670
        %v672 = vpop.f32.mrb[0].mxu0
        %673 = vmatprep.mubr.f32.mxu0 0.0
        %674 = vmatmul.mubr.f32.gmra.mrb[0].mxu0 %v548
        %v675 = vpop.f32.mrb[0].mxu0
        %v676 = vadd.f32 0.0, %v675
        %v677 = vpop.f32.mrb[0].mxu0
        %678 = vmatprep.mubr.f32.mxu0 0.0
        %679 = vmatmul.mubr.f32.gmra.mrb[0].mxu0 %v551
        %v680 = vpop.f32.mrb[0].mxu0
        %v681 = vadd.f32 0.0, %v680
        %v682 = vpop.f32.mrb[0].mxu0
        %683 = vmatprep.mubr.f32.mxu0 0.0
        %684 = vmatmul.mubr.f32.gmra.mrb[0].mxu0 %v554
        %v685 = vpop.f32.mrb[0].mxu0
        %v686 = vadd.f32 0.0, %v685
        %v687 = vpop.f32.mrb[0].mxu0
        %688 = vmatprep.mubr.f32.mxu0 0.0
        %689 = vmatmul.mubr.f32.gmra.mrb[0].mxu0 %v557
        %v690 = vpop.f32.mrb[0].mxu0
        %v691 = vadd.f32 0.0, %v690
        %v692 = vpop.f32.mrb[0].mxu0
        %693 = vmatprep.mubr.f32.mxu0 0.0
        %694 = vmatmul.mubr.f32.gmra.mrb[0].mxu0 %v560
        %v695 = vpop.f32.mrb[0].mxu0
        %v696 = vadd.f32 0.0, %v695
        %v697 = vpop.f32.mrb[0].mxu0
        %698 = vmatprep.mubr.f32.mxu0 0.0
        %699 = vmatmul.mubr.f32.gmra.mrb[0].mxu0 %v563
        %v700 = vpop.f32.mrb[0].mxu0
        %v701 = vadd.f32 0.0, %v700
        %v702 = vpop.f32.mrb[0].mxu0
        %703 = vmatprep.mubr.f32.mxu0 0.0
        %704 = vmatmul.mubr.f32.gmra.mrb[0].mxu0 %v566
        %v705 = vpop.f32.mrb[0].mxu0
        %v706 = vadd.f32 0.0, %v705
        %v707 = vpop.f32.mrb[0].mxu0
        %708 = vmatprep.mubr.f32.mxu0 0.0
        %709 = vmatmul.mubr.f32.gmra.mrb[0].mxu0 %v569
        %v710 = vpop.f32.mrb[0].mxu0
        %v711 = vadd.f32 0.0, %v710
        %v712 = vpop.f32.mrb[0].mxu0
        %713 = vmatprep.mubr.f32.mxu0 0.0
        %714 = vmatmul.mubr.f32.gmra.mrb[0].mxu0 %v572
        %v715 = vpop.f32.mrb[0].mxu0
        %v716 = vadd.f32 0.0, %v715
        %v717 = vpop.f32.mrb[0].mxu0
        %718 = vdwg.mxu0
        %v719 = vld [vmem:[%s3] sm:$0xff]
        %v720 = vld [vmem:[%s3 + $0x8] sm:$0xff]
        %v721 = vld [vmem:[%s3 + $0x10] sm:$0xff]
        %v722 = vld [vmem:[%s3 + $0x18] sm:$0xff]
        %723 = vmatprep.subr.mxu0 0.0
        %724 = vmatpush1.msra.mxu0 %v719
        %725 = vmatprep.subr.mxu0 0.0
        %726 = vmatpush1.msra.mxu0 %v720
        %727 = vmatprep.subr.mxu0 0.0
        %728 = vmatpush1.msra.mxu0 %v721
        %729 = vmatprep.subr.mxu0 0.0
        %730 = vmatpush1.msra.mxu0 %v722
        %731 = vmatprep.subr.mxu0 0.0
        %732 = vmatpush1.msra.mxu0 0.0
        %733 = vmatprep.subr.mxu0 0.0
        %734 = vmatpush1.msra.mxu0 0.0
        %735 = vmatprep.subr.mxu0 0.0
        %736 = vmatpush1.msra.mxu0 0.0
        %737 = vmatprep.subr.mxu0 0.0
        %738 = vmatpush1.msra.mxu0 0.0
        %739 = vmatprep.subr.mxu0 0.0
        %740 = vmatpush1.msra.mxu0 0.0
        %741 = vmatprep.subr.mxu0 0.0
        %742 = vmatpush1.msra.mxu0 0.0
        %743 = vmatprep.subr.mxu0 0.0
        %744 = vmatpush1.msra.mxu0 0.0
        %745 = vmatprep.subr.mxu0 0.0
        %746 = vmatpush1.msra.mxu0 0.0
        %747 = vmatprep.subr.mxu0 0.0
        %748 = vmatpush1.msra.mxu0 0.0
        %749 = vmatprep.subr.mxu0 0.0
        %750 = vmatpush1.msra.mxu0 0.0
        %751 = vmatprep.subr.mxu0 0.0
        %752 = vmatpush1.msra.mxu0 0.0
        %753 = vmatprep.subr.mxu0 0.0
        %754 = vmatpush1.msra.mxu0 0.0
        %755 = vmatprep.subr.mxu0 0.0
        %756 = vmatpush1.msra.mxu0 0.0
        %757 = vmatprep.subr.mxu0 0.0
        %758 = vmatpush1.msra.mxu0 0.0
        %759 = vmatprep.subr.mxu0 0.0
        %760 = vmatpush1.msra.mxu0 0.0
        %761 = vmatprep.subr.mxu0 0.0
        %762 = vmatpush1.msra.mxu0 0.0
        %763 = vmatprep.subr.mxu0 0.0
        %764 = vmatpush1.msra.mxu0 0.0
        %765 = vmatprep.subr.mxu0 0.0
        %766 = vmatpush1.msra.mxu0 0.0
        %767 = vmatprep.subr.mxu0 0.0
        %768 = vmatpush1.msra.mxu0 0.0
        %769 = vmatprep.subr.mxu0 0.0
        %770 = vmatpush1.msra.mxu0 0.0
        %771 = vmatprep.subr.mxu0 0.0
        %772 = vmatpush1.msra.mxu0 0.0
        %773 = vmatprep.subr.mxu0 0.0
        %774 = vmatpush1.msra.mxu0 0.0
        %775 = vmatprep.subr.mxu0 0.0
        %776 = vmatpush1.msra.mxu0 0.0
        %777 = vmatprep.subr.mxu0 0.0
        %778 = vmatpush1.msra.mxu0 0.0
        %779 = vmatprep.subr.mxu0 0.0
        %780 = vmatpush1.msra.mxu0 0.0
        %781 = vmatprep.subr.mxu0 0.0
        %782 = vmatpush1.msra.mxu0 0.0
        %783 = vmatprep.subr.mxu0 0.0
        %784 = vmatpush1.msra.mxu0 0.0
        %785 = vmatprep.subr.mxu0 0.0
        %786 = vmatpush1.msra.mxu0 0.0
        %787 = vmatprep.mubr.f32.mxu0 0.0
        %788 = vmatmul.mubr.f32.gmra.mrb[0].mxu0 %v527
        %v789 = vpop.f32.mrb[0].mxu0
        %v790 = vadd.f32 0.0, %v789
        %v791 = vpop.f32.mrb[0].mxu0
        %792 = vmatprep.mubr.f32.mxu0 0.0
        %793 = vmatmul.mubr.f32.gmra.mrb[0].mxu0 %v530
        %v794 = vpop.f32.mrb[0].mxu0
        %v795 = vadd.f32 0.0, %v794
        %v796 = vpop.f32.mrb[0].mxu0
        %797 = vmatprep.mubr.f32.mxu0 0.0
        %798 = vmatmul.mubr.f32.gmra.mrb[0].mxu0 %v533
        %v799 = vpop.f32.mrb[0].mxu0
        %v800 = vadd.f32 0.0, %v799
        %v801 = vpop.f32.mrb[0].mxu0
        %802 = vmatprep.mubr.f32.mxu0 0.0
        %803 = vmatmul.mubr.f32.gmra.mrb[0].mxu0 %v536
        %v804 = vpop.f32.mrb[0].mxu0
        %v805 = vadd.f32 0.0, %v804
        %v806 = vpop.f32.mrb[0].mxu0
        %807 = vmatprep.mubr.f32.mxu0 0.0
        %808 = vmatmul.mubr.f32.gmra.mrb[0].mxu0 %v539
        %v809 = vpop.f32.mrb[0].mxu0
        %v810 = vadd.f32 0.0, %v809
        %v811 = vpop.f32.mrb[0].mxu0
        %812 = vmatprep.mubr.f32.mxu0 0.0
        %813 = vmatmul.mubr.f32.gmra.mrb[0].mxu0 %v542
        %v814 = vpop.f32.mrb[0].mxu0
        %v815 = vadd.f32 0.0, %v814
        %v816 = vpop.f32.mrb[0].mxu0
        %817 = vmatprep.mubr.f32.mxu0 0.0
        %818 = vmatmul.mubr.f32.gmra.mrb[0].mxu0 %v545
        %v819 = vpop.f32.mrb[0].mxu0
        %v820 = vadd.f32 0.0, %v819
        %v821 = vpop.f32.mrb[0].mxu0
        %822 = vmatprep.mubr.f32.mxu0 0.0
        %823 = vmatmul.mubr.f32.gmra.mrb[0].mxu0 %v548
        %v824 = vpop.f32.mrb[0].mxu0
        %v825 = vadd.f32 0.0, %v824
        %v826 = vpop.f32.mrb[0].mxu0
        %827 = vmatprep.mubr.f32.mxu0 0.0
        %828 = vmatmul.mubr.f32.gmra.mrb[0].mxu0 %v551
        %v829 = vpop.f32.mrb[0].mxu0
        %v830 = vadd.f32 0.0, %v829
        %v831 = vpop.f32.mrb[0].mxu0
        %832 = vmatprep.mubr.f32.mxu0 0.0
        %833 = vmatmul.mubr.f32.gmra.mrb[0].mxu0 %v554
        %v834 = vpop.f32.mrb[0].mxu0
        %v835 = vadd.f32 0.0, %v834
        %v836 = vpop.f32.mrb[0].mxu0
        %837 = vmatprep.mubr.f32.mxu0 0.0
        %838 = vmatmul.mubr.f32.gmra.mrb[0].mxu0 %v557
        %v839 = vpop.f32.mrb[0].mxu0
        %v840 = vadd.f32 0.0, %v839
        %v841 = vpop.f32.mrb[0].mxu0
        %842 = vmatprep.mubr.f32.mxu0 0.0
        %843 = vmatmul.mubr.f32.gmra.mrb[0].mxu0 %v560
        %v844 = vpop.f32.mrb[0].mxu0
        %v845 = vadd.f32 0.0, %v844
        %v846 = vpop.f32.mrb[0].mxu0
        %847 = vmatprep.mubr.f32.mxu0 0.0
        %848 = vmatmul.mubr.f32.gmra.mrb[0].mxu0 %v563
        %v849 = vpop.f32.mrb[0].mxu0
        %v850 = vadd.f32 0.0, %v849
        %v851 = vpop.f32.mrb[0].mxu0
        %852 = vmatprep.mubr.f32.mxu0 0.0
        %853 = vmatmul.mubr.f32.gmra.mrb[0].mxu0 %v566
        %v854 = vpop.f32.mrb[0].mxu0
        %v855 = vadd.f32 0.0, %v854
        %v856 = vpop.f32.mrb[0].mxu0
        %857 = vmatprep.mubr.f32.mxu0 0.0
        %858 = vmatmul.mubr.f32.gmra.mrb[0].mxu0 %v569
        %v859 = vpop.f32.mrb[0].mxu0
        %v860 = vadd.f32 0.0, %v859
        %v861 = vpop.f32.mrb[0].mxu0
        %862 = vmatprep.mubr.f32.mxu0 0.0
        %863 = vmatmul.mubr.f32.gmra.mrb[0].mxu0 %v572
        %v864 = vpop.f32.mrb[0].mxu0
        %v865 = vadd.f32 0.0, %v864
        %v866 = vpop.f32.mrb[0].mxu0
        %867 = vdwg.mxu0
        %vm868 = vcmask 64512
        %v870 = vsel %vm868, %v241, 0
        %872 = vmatprep.subr.mxu0 0.0
        %873 = vmatpush1.msra.mxu0 %v646
        %874 = vmatprep.subr.mxu0 0.0
        %875 = vmatpush1.msra.mxu0 0.0
        %876 = vmatprep.subr.mxu0 0.0
        %877 = vmatpush1.msra.mxu0 0.0
        %878 = vmatprep.subr.mxu0 0.0
        %879 = vmatpush1.msra.mxu0 0.0
        %880 = vmatprep.subr.mxu0 0.0
        %881 = vmatpush1.msra.mxu0 0.0
        %882 = vmatprep.subr.mxu0 0.0
        %883 = vmatpush1.msra.mxu0 0.0
        %884 = vmatprep.subr.mxu0 0.0
        %885 = vmatpush1.msra.mxu0 0.0
        %886 = vmatprep.subr.mxu0 0.0
        %887 = vmatpush1.msra.mxu0 0.0
        %888 = vmatprep.subr.mxu0 0.0
        %889 = vmatpush1.msra.mxu0 0.0
        %890 = vmatprep.subr.mxu0 0.0
        %891 = vmatpush1.msra.mxu0 0.0
        %892 = vmatprep.subr.mxu0 0.0
        %893 = vmatpush1.msra.mxu0 0.0
        %894 = vmatprep.subr.mxu0 0.0
        %895 = vmatpush1.msra.mxu0 0.0
        %896 = vmatprep.subr.mxu0 0.0
        %897 = vmatpush1.msra.mxu0 0.0
        %898 = vmatprep.subr.mxu0 0.0
        %899 = vmatpush1.msra.mxu0 0.0
        %900 = vmatprep.subr.mxu0 0.0
        %901 = vmatpush1.msra.mxu0 0.0
        %902 = vmatprep.subr.mxu0 0.0
        %903 = vmatpush1.msra.mxu0 0.0
        %904 = vmatprep.subr.mxu0 0.0
        %905 = vmatpush1.msra.mxu0 0.0
        %906 = vmatprep.subr.mxu0 0.0
        %907 = vmatpush1.msra.mxu0 0.0
        %908 = vmatprep.subr.mxu0 0.0
        %909 = vmatpush1.msra.mxu0 0.0
        %910 = vmatprep.subr.mxu0 0.0
        %911 = vmatpush1.msra.mxu0 0.0
        %912 = vmatprep.subr.mxu0 0.0
        %913 = vmatpush1.msra.mxu0 0.0
        %914 = vmatprep.subr.mxu0 0.0
        %915 = vmatpush1.msra.mxu0 0.0
        %916 = vmatprep.subr.mxu0 0.0
        %917 = vmatpush1.msra.mxu0 0.0
        %918 = vmatprep.subr.mxu0 0.0
        %919 = vmatpush1.msra.mxu0 0.0
        %920 = vmatprep.subr.mxu0 0.0
        %921 = vmatpush1.msra.mxu0 0.0
        %922 = vmatprep.subr.mxu0 0.0
        %923 = vmatpush1.msra.mxu0 0.0
        %924 = vmatprep.subr.mxu0 0.0
        %925 = vmatpush1.msra.mxu0 0.0
        %926 = vmatprep.subr.mxu0 0.0
        %927 = vmatpush1.msra.mxu0 0.0
        %928 = vmatprep.subr.mxu0 0.0
        %929 = vmatpush1.msra.mxu0 0.0
        %930 = vmatprep.subr.mxu0 0.0
        %931 = vmatpush1.msra.mxu0 0.0
        %932 = vmatprep.subr.mxu0 0.0
        %933 = vmatpush1.msra.mxu0 0.0
        %934 = vmatprep.subr.mxu0 0.0
        %935 = vmatpush1.msra.mxu0 0.0
        %936 = vmatprep.mubr.f32.mxu0 0.0
        %937 = vmatmul.mubr.f32.gmra.mrb[0].mxu0 %v870
        %v938 = vpop.f32.mrb[0].mxu0
        %v939 = vadd.f32 0.0, %v938
        %v940 = vpop.f32.mrb[0].mxu0
        %941 = vdwg.mxu0
        %v943 = vsel %vm868, %v242, 0
        %945 = vmatprep.subr.mxu0 0.0
        %946 = vmatpush1.msra.mxu0 %v656
        %947 = vmatprep.subr.mxu0 0.0
        %948 = vmatpush1.msra.mxu0 0.0
        %949 = vmatprep.subr.mxu0 0.0
        %950 = vmatpush1.msra.mxu0 0.0
        %951 = vmatprep.subr.mxu0 0.0
        %952 = vmatpush1.msra.mxu0 0.0
        %953 = vmatprep.subr.mxu0 0.0
        %954 = vmatpush1.msra.mxu0 0.0
        %955 = vmatprep.subr.mxu0 0.0
        %956 = vmatpush1.msra.mxu0 0.0
        %957 = vmatprep.subr.mxu0 0.0
        %958 = vmatpush1.msra.mxu0 0.0
        %959 = vmatprep.subr.mxu0 0.0
        %960 = vmatpush1.msra.mxu0 0.0
        %961 = vmatprep.subr.mxu0 0.0
        %962 = vmatpush1.msra.mxu0 0.0
        %963 = vmatprep.subr.mxu0 0.0
        %964 = vmatpush1.msra.mxu0 0.0
        %965 = vmatprep.subr.mxu0 0.0
        %966 = vmatpush1.msra.mxu0 0.0
        %967 = vmatprep.subr.mxu0 0.0
        %968 = vmatpush1.msra.mxu0 0.0
        %969 = vmatprep.subr.mxu0 0.0
        %970 = vmatpush1.msra.mxu0 0.0
        %971 = vmatprep.subr.mxu0 0.0
        %972 = vmatpush1.msra.mxu0 0.0
        %973 = vmatprep.subr.mxu0 0.0
        %974 = vmatpush1.msra.mxu0 0.0
        %975 = vmatprep.subr.mxu0 0.0
        %976 = vmatpush1.msra.mxu0 0.0
        %977 = vmatprep.subr.mxu0 0.0
        %978 = vmatpush1.msra.mxu0 0.0
        %979 = vmatprep.subr.mxu0 0.0
        %980 = vmatpush1.msra.mxu0 0.0
        %981 = vmatprep.subr.mxu0 0.0
        %982 = vmatpush1.msra.mxu0 0.0
        %983 = vmatprep.subr.mxu0 0.0
        %984 = vmatpush1.msra.mxu0 0.0
        %985 = vmatprep.subr.mxu0 0.0
        %986 = vmatpush1.msra.mxu0 0.0
        %987 = vmatprep.subr.mxu0 0.0
        %988 = vmatpush1.msra.mxu0 0.0
        %989 = vmatprep.subr.mxu0 0.0
        %990 = vmatpush1.msra.mxu0 0.0
        %991 = vmatprep.subr.mxu0 0.0
        %992 = vmatpush1.msra.mxu0 0.0
        %993 = vmatprep.subr.mxu0 0.0
        %994 = vmatpush1.msra.mxu0 0.0
        %995 = vmatprep.subr.mxu0 0.0
        %996 = vmatpush1.msra.mxu0 0.0
        %997 = vmatprep.subr.mxu0 0.0
        %998 = vmatpush1.msra.mxu0 0.0
        %999 = vmatprep.subr.mxu0 0.0
        %1000 = vmatpush1.msra.mxu0 0.0
        %1001 = vmatprep.subr.mxu0 0.0
        %1002 = vmatpush1.msra.mxu0 0.0
        %1003 = vmatprep.subr.mxu0 0.0
        %1004 = vmatpush1.msra.mxu0 0.0
        %1005 = vmatprep.subr.mxu0 0.0
        %1006 = vmatpush1.msra.mxu0 0.0
        %1007 = vmatprep.subr.mxu0 0.0
        %1008 = vmatpush1.msra.mxu0 0.0
        %1009 = vmatprep.mubr.f32.mxu0 0.0
        %1010 = vmatmul.mubr.f32.gmra.mrb[0].mxu0 %v943
        %v1011 = vpop.f32.mrb[0].mxu0
        %v1012 = vadd.f32 0.0, %v1011
        %v1013 = vpop.f32.mrb[0].mxu0
        %1014 = vdwg.mxu0
        %v1016 = vsel %vm868, %v243, 0
        %1018 = vmatprep.subr.mxu0 0.0
        %1019 = vmatpush1.msra.mxu0 %v666
        %1020 = vmatprep.subr.mxu0 0.0
        %1021 = vmatpush1.msra.mxu0 0.0
        %1022 = vmatprep.subr.mxu0 0.0
        %1023 = vmatpush1.msra.mxu0 0.0
        %1024 = vmatprep.subr.mxu0 0.0
        %1025 = vmatpush1.msra.mxu0 0.0
        %1026 = vmatprep.subr.mxu0 0.0
        %1027 = vmatpush1.msra.mxu0 0.0
        %1028 = vmatprep.subr.mxu0 0.0
        %1029 = vmatpush1.msra.mxu0 0.0
        %1030 = vmatprep.subr.mxu0 0.0
        %1031 = vmatpush1.msra.mxu0 0.0
        %1032 = vmatprep.subr.mxu0 0.0
        %1033 = vmatpush1.msra.mxu0 0.0
        %1034 = vmatprep.subr.mxu0 0.0
        %1035 = vmatpush1.msra.mxu0 0.0
        %1036 = vmatprep.subr.mxu0 0.0
        %1037 = vmatpush1.msra.mxu0 0.0
        %1038 = vmatprep.subr.mxu0 0.0
        %1039 = vmatpush1.msra.mxu0 0.0
        %1040 = vmatprep.subr.mxu0 0.0
        %1041 = vmatpush1.msra.mxu0 0.0
        %1042 = vmatprep.subr.mxu0 0.0
        %1043 = vmatpush1.msra.mxu0 0.0
        %1044 = vmatprep.subr.mxu0 0.0
        %1045 = vmatpush1.msra.mxu0 0.0
        %1046 = vmatprep.subr.mxu0 0.0
        %1047 = vmatpush1.msra.mxu0 0.0
        %1048 = vmatprep.subr.mxu0 0.0
        %1049 = vmatpush1.msra.mxu0 0.0
        %1050 = vmatprep.subr.mxu0 0.0
        %1051 = vmatpush1.msra.mxu0 0.0
        %1052 = vmatprep.subr.mxu0 0.0
        %1053 = vmatpush1.msra.mxu0 0.0
        %1054 = vmatprep.subr.mxu0 0.0
        %1055 = vmatpush1.msra.mxu0 0.0
        %1056 = vmatprep.subr.mxu0 0.0
        %1057 = vmatpush1.msra.mxu0 0.0
        %1058 = vmatprep.subr.mxu0 0.0
        %1059 = vmatpush1.msra.mxu0 0.0
        %1060 = vmatprep.subr.mxu0 0.0
        %1061 = vmatpush1.msra.mxu0 0.0
        %1062 = vmatprep.subr.mxu0 0.0
        %1063 = vmatpush1.msra.mxu0 0.0
        %1064 = vmatprep.subr.mxu0 0.0
        %1065 = vmatpush1.msra.mxu0 0.0
        %1066 = vmatprep.subr.mxu0 0.0
        %1067 = vmatpush1.msra.mxu0 0.0
        %1068 = vmatprep.subr.mxu0 0.0
        %1069 = vmatpush1.msra.mxu0 0.0
        %1070 = vmatprep.subr.mxu0 0.0
        %1071 = vmatpush1.msra.mxu0 0.0
        %1072 = vmatprep.subr.mxu0 0.0
        %1073 = vmatpush1.msra.mxu0 0.0
        %1074 = vmatprep.subr.mxu0 0.0
        %1075 = vmatpush1.msra.mxu0 0.0
        %1076 = vmatprep.subr.mxu0 0.0
        %1077 = vmatpush1.msra.mxu0 0.0
        %1078 = vmatprep.subr.mxu0 0.0
        %1079 = vmatpush1.msra.mxu0 0.0
        %1080 = vmatprep.subr.mxu0 0.0
        %1081 = vmatpush1.msra.mxu0 0.0
        %1082 = vmatprep.mubr.f32.mxu0 0.0
        %1083 = vmatmul.mubr.f32.gmra.mrb[0].mxu0 %v1016
        %v1084 = vpop.f32.mrb[0].mxu0
        %v1085 = vadd.f32 0.0, %v1084
        %v1086 = vpop.f32.mrb[0].mxu0
        %1087 = vdwg.mxu0
        %v1089 = vsel %vm868, %v244, 0
        %1091 = vmatprep.subr.mxu0 0.0
        %1092 = vmatpush1.msra.mxu0 %v676
        %1093 = vmatprep.subr.mxu0 0.0
        %1094 = vmatpush1.msra.mxu0 0.0
        %1095 = vmatprep.subr.mxu0 0.0
        %1096 = vmatpush1.msra.mxu0 0.0
        %1097 = vmatprep.subr.mxu0 0.0
        %1098 = vmatpush1.msra.mxu0 0.0
        %1099 = vmatprep.subr.mxu0 0.0
        %1100 = vmatpush1.msra.mxu0 0.0
        %1101 = vmatprep.subr.mxu0 0.0
        %1102 = vmatpush1.msra.mxu0 0.0
        %1103 = vmatprep.subr.mxu0 0.0
        %1104 = vmatpush1.msra.mxu0 0.0
        %1105 = vmatprep.subr.mxu0 0.0
        %1106 = vmatpush1.msra.mxu0 0.0
        %1107 = vmatprep.subr.mxu0 0.0
        %1108 = vmatpush1.msra.mxu0 0.0
        %1109 = vmatprep.subr.mxu0 0.0
        %1110 = vmatpush1.msra.mxu0 0.0
        %1111 = vmatprep.subr.mxu0 0.0
        %1112 = vmatpush1.msra.mxu0 0.0
        %1113 = vmatprep.subr.mxu0 0.0
        %1114 = vmatpush1.msra.mxu0 0.0
        %1115 = vmatprep.subr.mxu0 0.0
        %1116 = vmatpush1.msra.mxu0 0.0
        %1117 = vmatprep.subr.mxu0 0.0
        %1118 = vmatpush1.msra.mxu0 0.0
        %1119 = vmatprep.subr.mxu0 0.0
        %1120 = vmatpush1.msra.mxu0 0.0
        %1121 = vmatprep.subr.mxu0 0.0
        %1122 = vmatpush1.msra.mxu0 0.0
        %1123 = vmatprep.subr.mxu0 0.0
        %1124 = vmatpush1.msra.mxu0 0.0
        %1125 = vmatprep.subr.mxu0 0.0
        %1126 = vmatpush1.msra.mxu0 0.0
        %1127 = vmatprep.subr.mxu0 0.0
        %1128 = vmatpush1.msra.mxu0 0.0
        %1129 = vmatprep.subr.mxu0 0.0
        %1130 = vmatpush1.msra.mxu0 0.0
        %1131 = vmatprep.subr.mxu0 0.0
        %1132 = vmatpush1.msra.mxu0 0.0
        %1133 = vmatprep.subr.mxu0 0.0
        %1134 = vmatpush1.msra.mxu0 0.0
        %1135 = vmatprep.subr.mxu0 0.0
        %1136 = vmatpush1.msra.mxu0 0.0
        %1137 = vmatprep.subr.mxu0 0.0
        %1138 = vmatpush1.msra.mxu0 0.0
        %1139 = vmatprep.subr.mxu0 0.0
        %1140 = vmatpush1.msra.mxu0 0.0
        %1141 = vmatprep.subr.mxu0 0.0
        %1142 = vmatpush1.msra.mxu0 0.0
        %1143 = vmatprep.subr.mxu0 0.0
        %1144 = vmatpush1.msra.mxu0 0.0
        %1145 = vmatprep.subr.mxu0 0.0
        %1146 = vmatpush1.msra.mxu0 0.0
        %1147 = vmatprep.subr.mxu0 0.0
        %1148 = vmatpush1.msra.mxu0 0.0
        %1149 = vmatprep.subr.mxu0 0.0
        %1150 = vmatpush1.msra.mxu0 0.0
        %1151 = vmatprep.subr.mxu0 0.0
        %1152 = vmatpush1.msra.mxu0 0.0
        %1153 = vmatprep.subr.mxu0 0.0
        %1154 = vmatpush1.msra.mxu0 0.0
        %1155 = vmatprep.mubr.f32.mxu0 0.0
        %1156 = vmatmul.mubr.f32.gmra.mrb[0].mxu0 %v1089
        %v1157 = vpop.f32.mrb[0].mxu0
        %v1158 = vadd.f32 0.0, %v1157
        %v1159 = vpop.f32.mrb[0].mxu0
        %1160 = vdwg.mxu0
        %v1162 = vsel %vm868, %v245, 0
        %1164 = vmatprep.subr.mxu0 0.0
        %1165 = vmatpush1.msra.mxu0 %v686
        %1166 = vmatprep.subr.mxu0 0.0
        %1167 = vmatpush1.msra.mxu0 0.0
        %1168 = vmatprep.subr.mxu0 0.0
        %1169 = vmatpush1.msra.mxu0 0.0
        %1170 = vmatprep.subr.mxu0 0.0
        %1171 = vmatpush1.msra.mxu0 0.0
        %1172 = vmatprep.subr.mxu0 0.0
        %1173 = vmatpush1.msra.mxu0 0.0
        %1174 = vmatprep.subr.mxu0 0.0
        %1175 = vmatpush1.msra.mxu0 0.0
        %1176 = vmatprep.subr.mxu0 0.0
        %1177 = vmatpush1.msra.mxu0 0.0
        %1178 = vmatprep.subr.mxu0 0.0
        %1179 = vmatpush1.msra.mxu0 0.0
        %1180 = vmatprep.subr.mxu0 0.0
        %1181 = vmatpush1.msra.mxu0 0.0
        %1182 = vmatprep.subr.mxu0 0.0
        %1183 = vmatpush1.msra.mxu0 0.0
        %1184 = vmatprep.subr.mxu0 0.0
        %1185 = vmatpush1.msra.mxu0 0.0
        %1186 = vmatprep.subr.mxu0 0.0
        %1187 = vmatpush1.msra.mxu0 0.0
        %1188 = vmatprep.subr.mxu0 0.0
        %1189 = vmatpush1.msra.mxu0 0.0
        %1190 = vmatprep.subr.mxu0 0.0
        %1191 = vmatpush1.msra.mxu0 0.0
        %1192 = vmatprep.subr.mxu0 0.0
        %1193 = vmatpush1.msra.mxu0 0.0
        %1194 = vmatprep.subr.mxu0 0.0
        %1195 = vmatpush1.msra.mxu0 0.0
        %1196 = vmatprep.subr.mxu0 0.0
        %1197 = vmatpush1.msra.mxu0 0.0
        %1198 = vmatprep.subr.mxu0 0.0
        %1199 = vmatpush1.msra.mxu0 0.0
        %1200 = vmatprep.subr.mxu0 0.0
        %1201 = vmatpush1.msra.mxu0 0.0
        %1202 = vmatprep.subr.mxu0 0.0
        %1203 = vmatpush1.msra.mxu0 0.0
        %1204 = vmatprep.subr.mxu0 0.0
        %1205 = vmatpush1.msra.mxu0 0.0
        %1206 = vmatprep.subr.mxu0 0.0
        %1207 = vmatpush1.msra.mxu0 0.0
        %1208 = vmatprep.subr.mxu0 0.0
        %1209 = vmatpush1.msra.mxu0 0.0
        %1210 = vmatprep.subr.mxu0 0.0
        %1211 = vmatpush1.msra.mxu0 0.0
        %1212 = vmatprep.subr.mxu0 0.0
        %1213 = vmatpush1.msra.mxu0 0.0
        %1214 = vmatprep.subr.mxu0 0.0
        %1215 = vmatpush1.msra.mxu0 0.0
        %1216 = vmatprep.subr.mxu0 0.0
        %1217 = vmatpush1.msra.mxu0 0.0
        %1218 = vmatprep.subr.mxu0 0.0
        %1219 = vmatpush1.msra.mxu0 0.0
        %1220 = vmatprep.subr.mxu0 0.0
        %1221 = vmatpush1.msra.mxu0 0.0
        %1222 = vmatprep.subr.mxu0 0.0
        %1223 = vmatpush1.msra.mxu0 0.0
        %1224 = vmatprep.subr.mxu0 0.0
        %1225 = vmatpush1.msra.mxu0 0.0
        %1226 = vmatprep.subr.mxu0 0.0
        %1227 = vmatpush1.msra.mxu0 0.0
        %1228 = vmatprep.mubr.f32.mxu0 0.0
        %1229 = vmatmul.mubr.f32.gmra.mrb[0].mxu0 %v1162
        %v1230 = vpop.f32.mrb[0].mxu0
        %v1231 = vadd.f32 0.0, %v1230
        %v1232 = vpop.f32.mrb[0].mxu0
        %1233 = vdwg.mxu0
        %v1235 = vsel %vm868, %v246, 0
        %1237 = vmatprep.subr.mxu0 0.0
        %1238 = vmatpush1.msra.mxu0 %v696
        %1239 = vmatprep.subr.mxu0 0.0
        %1240 = vmatpush1.msra.mxu0 0.0
        %1241 = vmatprep.subr.mxu0 0.0
        %1242 = vmatpush1.msra.mxu0 0.0
        %1243 = vmatprep.subr.mxu0 0.0
        %1244 = vmatpush1.msra.mxu0 0.0
        %1245 = vmatprep.subr.mxu0 0.0
        %1246 = vmatpush1.msra.mxu0 0.0
        %1247 = vmatprep.subr.mxu0 0.0
        %1248 = vmatpush1.msra.mxu0 0.0
        %1249 = vmatprep.subr.mxu0 0.0
        %1250 = vmatpush1.msra.mxu0 0.0
        %1251 = vmatprep.subr.mxu0 0.0
        %1252 = vmatpush1.msra.mxu0 0.0
        %1253 = vmatprep.subr.mxu0 0.0
        %1254 = vmatpush1.msra.mxu0 0.0
        %1255 = vmatprep.subr.mxu0 0.0
        %1256 = vmatpush1.msra.mxu0 0.0
        %1257 = vmatprep.subr.mxu0 0.0
        %1258 = vmatpush1.msra.mxu0 0.0
        %1259 = vmatprep.subr.mxu0 0.0
        %1260 = vmatpush1.msra.mxu0 0.0
        %1261 = vmatprep.subr.mxu0 0.0
        %1262 = vmatpush1.msra.mxu0 0.0
        %1263 = vmatprep.subr.mxu0 0.0
        %1264 = vmatpush1.msra.mxu0 0.0
        %1265 = vmatprep.subr.mxu0 0.0
        %1266 = vmatpush1.msra.mxu0 0.0
        %1267 = vmatprep.subr.mxu0 0.0
        %1268 = vmatpush1.msra.mxu0 0.0
        %1269 = vmatprep.subr.mxu0 0.0
        %1270 = vmatpush1.msra.mxu0 0.0
        %1271 = vmatprep.subr.mxu0 0.0
        %1272 = vmatpush1.msra.mxu0 0.0
        %1273 = vmatprep.subr.mxu0 0.0
        %1274 = vmatpush1.msra.mxu0 0.0
        %1275 = vmatprep.subr.mxu0 0.0
        %1276 = vmatpush1.msra.mxu0 0.0
        %1277 = vmatprep.subr.mxu0 0.0
        %1278 = vmatpush1.msra.mxu0 0.0
        %1279 = vmatprep.subr.mxu0 0.0
        %1280 = vmatpush1.msra.mxu0 0.0
        %1281 = vmatprep.subr.mxu0 0.0
        %1282 = vmatpush1.msra.mxu0 0.0
        %1283 = vmatprep.subr.mxu0 0.0
        %1284 = vmatpush1.msra.mxu0 0.0
        %1285 = vmatprep.subr.mxu0 0.0
        %1286 = vmatpush1.msra.mxu0 0.0
        %1287 = vmatprep.subr.mxu0 0.0
        %1288 = vmatpush1.msra.mxu0 0.0
        %1289 = vmatprep.subr.mxu0 0.0
        %1290 = vmatpush1.msra.mxu0 0.0
        %1291 = vmatprep.subr.mxu0 0.0
        %1292 = vmatpush1.msra.mxu0 0.0
        %1293 = vmatprep.subr.mxu0 0.0
        %1294 = vmatpush1.msra.mxu0 0.0
        %1295 = vmatprep.subr.mxu0 0.0
        %1296 = vmatpush1.msra.mxu0 0.0
        %1297 = vmatprep.subr.mxu0 0.0
        %1298 = vmatpush1.msra.mxu0 0.0
        %1299 = vmatprep.subr.mxu0 0.0
        %1300 = vmatpush1.msra.mxu0 0.0
        %1301 = vmatprep.mubr.f32.mxu0 0.0
        %1302 = vmatmul.mubr.f32.gmra.mrb[0].mxu0 %v1235
        %v1303 = vpop.f32.mrb[0].mxu0
        %v1304 = vadd.f32 0.0, %v1303
        %v1305 = vpop.f32.mrb[0].mxu0
        %1306 = vdwg.mxu0
        %v1308 = vsel %vm868, %v247, 0
        %1310 = vmatprep.subr.mxu0 0.0
        %1311 = vmatpush1.msra.mxu0 %v706
        %1312 = vmatprep.subr.mxu0 0.0
        %1313 = vmatpush1.msra.mxu0 0.0
        %1314 = vmatprep.subr.mxu0 0.0
        %1315 = vmatpush1.msra.mxu0 0.0
        %1316 = vmatprep.subr.mxu0 0.0
        %1317 = vmatpush1.msra.mxu0 0.0
        %1318 = vmatprep.subr.mxu0 0.0
        %1319 = vmatpush1.msra.mxu0 0.0
        %1320 = vmatprep.subr.mxu0 0.0
        %1321 = vmatpush1.msra.mxu0 0.0
        %1322 = vmatprep.subr.mxu0 0.0
        %1323 = vmatpush1.msra.mxu0 0.0
        %1324 = vmatprep.subr.mxu0 0.0
        %1325 = vmatpush1.msra.mxu0 0.0
        %1326 = vmatprep.subr.mxu0 0.0
        %1327 = vmatpush1.msra.mxu0 0.0
        %1328 = vmatprep.subr.mxu0 0.0
        %1329 = vmatpush1.msra.mxu0 0.0
        %1330 = vmatprep.subr.mxu0 0.0
        %1331 = vmatpush1.msra.mxu0 0.0
        %1332 = vmatprep.subr.mxu0 0.0
        %1333 = vmatpush1.msra.mxu0 0.0
        %1334 = vmatprep.subr.mxu0 0.0
        %1335 = vmatpush1.msra.mxu0 0.0
        %1336 = vmatprep.subr.mxu0 0.0
        %1337 = vmatpush1.msra.mxu0 0.0
        %1338 = vmatprep.subr.mxu0 0.0
        %1339 = vmatpush1.msra.mxu0 0.0
        %1340 = vmatprep.subr.mxu0 0.0
        %1341 = vmatpush1.msra.mxu0 0.0
        %1342 = vmatprep.subr.mxu0 0.0
        %1343 = vmatpush1.msra.mxu0 0.0
        %1344 = vmatprep.subr.mxu0 0.0
        %1345 = vmatpush1.msra.mxu0 0.0
        %1346 = vmatprep.subr.mxu0 0.0
        %1347 = vmatpush1.msra.mxu0 0.0
        %1348 = vmatprep.subr.mxu0 0.0
        %1349 = vmatpush1.msra.mxu0 0.0
        %1350 = vmatprep.subr.mxu0 0.0
        %1351 = vmatpush1.msra.mxu0 0.0
        %1352 = vmatprep.subr.mxu0 0.0
        %1353 = vmatpush1.msra.mxu0 0.0
        %1354 = vmatprep.subr.mxu0 0.0
        %1355 = vmatpush1.msra.mxu0 0.0
        %1356 = vmatprep.subr.mxu0 0.0
        %1357 = vmatpush1.msra.mxu0 0.0
        %1358 = vmatprep.subr.mxu0 0.0
        %1359 = vmatpush1.msra.mxu0 0.0
        %1360 = vmatprep.subr.mxu0 0.0
        %1361 = vmatpush1.msra.mxu0 0.0
        %1362 = vmatprep.subr.mxu0 0.0
        %1363 = vmatpush1.msra.mxu0 0.0
        %1364 = vmatprep.subr.mxu0 0.0
        %1365 = vmatpush1.msra.mxu0 0.0
        %1366 = vmatprep.subr.mxu0 0.0
        %1367 = vmatpush1.msra.mxu0 0.0
        %1368 = vmatprep.subr.mxu0 0.0
        %1369 = vmatpush1.msra.mxu0 0.0
        %1370 = vmatprep.subr.mxu0 0.0
        %1371 = vmatpush1.msra.mxu0 0.0
        %1372 = vmatprep.subr.mxu0 0.0
        %1373 = vmatpush1.msra.mxu0 0.0
        %1374 = vmatprep.mubr.f32.mxu0 0.0
        %1375 = vmatmul.mubr.f32.gmra.mrb[0].mxu0 %v1308
        %v1376 = vpop.f32.mrb[0].mxu0
        %v1377 = vadd.f32 0.0, %v1376
        %v1378 = vpop.f32.mrb[0].mxu0
        %1379 = vdwg.mxu0
        %v1381 = vsel %vm868, %v248, 0
        %1383 = vmatprep.subr.mxu0 0.0
        %1384 = vmatpush1.msra.mxu0 %v716
        %1385 = vmatprep.subr.mxu0 0.0
        %1386 = vmatpush1.msra.mxu0 0.0
        %1387 = vmatprep.subr.mxu0 0.0
        %1388 = vmatpush1.msra.mxu0 0.0
        %1389 = vmatprep.subr.mxu0 0.0
        %1390 = vmatpush1.msra.mxu0 0.0
        %1391 = vmatprep.subr.mxu0 0.0
        %1392 = vmatpush1.msra.mxu0 0.0
        %1393 = vmatprep.subr.mxu0 0.0
        %1394 = vmatpush1.msra.mxu0 0.0
        %1395 = vmatprep.subr.mxu0 0.0
        %1396 = vmatpush1.msra.mxu0 0.0
        %1397 = vmatprep.subr.mxu0 0.0
        %1398 = vmatpush1.msra.mxu0 0.0
        %1399 = vmatprep.subr.mxu0 0.0
        %1400 = vmatpush1.msra.mxu0 0.0
        %1401 = vmatprep.subr.mxu0 0.0
        %1402 = vmatpush1.msra.mxu0 0.0
        %1403 = vmatprep.subr.mxu0 0.0
        %1404 = vmatpush1.msra.mxu0 0.0
        %1405 = vmatprep.subr.mxu0 0.0
        %1406 = vmatpush1.msra.mxu0 0.0
        %1407 = vmatprep.subr.mxu0 0.0
        %1408 = vmatpush1.msra.mxu0 0.0
        %1409 = vmatprep.subr.mxu0 0.0
        %1410 = vmatpush1.msra.mxu0 0.0
        %1411 = vmatprep.subr.mxu0 0.0
        %1412 = vmatpush1.msra.mxu0 0.0
        %1413 = vmatprep.subr.mxu0 0.0
        %1414 = vmatpush1.msra.mxu0 0.0
        %1415 = vmatprep.subr.mxu0 0.0
        %1416 = vmatpush1.msra.mxu0 0.0
        %1417 = vmatprep.subr.mxu0 0.0
        %1418 = vmatpush1.msra.mxu0 0.0
        %1419 = vmatprep.subr.mxu0 0.0
        %1420 = vmatpush1.msra.mxu0 0.0
        %1421 = vmatprep.subr.mxu0 0.0
        %1422 = vmatpush1.msra.mxu0 0.0
        %1423 = vmatprep.subr.mxu0 0.0
        %1424 = vmatpush1.msra.mxu0 0.0
        %1425 = vmatprep.subr.mxu0 0.0
        %1426 = vmatpush1.msra.mxu0 0.0
        %1427 = vmatprep.subr.mxu0 0.0
        %1428 = vmatpush1.msra.mxu0 0.0
        %1429 = vmatprep.subr.mxu0 0.0
        %1430 = vmatpush1.msra.mxu0 0.0
        %1431 = vmatprep.subr.mxu0 0.0
        %1432 = vmatpush1.msra.mxu0 0.0
        %1433 = vmatprep.subr.mxu0 0.0
        %1434 = vmatpush1.msra.mxu0 0.0
        %1435 = vmatprep.subr.mxu0 0.0
        %1436 = vmatpush1.msra.mxu0 0.0
        %1437 = vmatprep.subr.mxu0 0.0
        %1438 = vmatpush1.msra.mxu0 0.0
        %1439 = vmatprep.subr.mxu0 0.0
        %1440 = vmatpush1.msra.mxu0 0.0
        %1441 = vmatprep.subr.mxu0 0.0
        %1442 = vmatpush1.msra.mxu0 0.0
        %1443 = vmatprep.subr.mxu0 0.0
        %1444 = vmatpush1.msra.mxu0 0.0
        %1445 = vmatprep.subr.mxu0 0.0
        %1446 = vmatpush1.msra.mxu0 0.0
        %1447 = vmatprep.mubr.f32.mxu0 0.0
        %1448 = vmatmul.mubr.f32.gmra.mrb[0].mxu0 %v1381
        %v1449 = vpop.f32.mrb[0].mxu0
        %v1450 = vadd.f32 0.0, %v1449
        %v1451 = vpop.f32.mrb[0].mxu0
        %1452 = vdwg.mxu0
        %v1454 = vsel %vm868, %v265, 0
        %1456 = vmatprep.subr.mxu0 0.0
        %1457 = vmatpush1.msra.mxu0 %v641
        %1458 = vmatprep.subr.mxu0 0.0
        %1459 = vmatpush1.msra.mxu0 0.0
        %1460 = vmatprep.subr.mxu0 0.0
        %1461 = vmatpush1.msra.mxu0 0.0
        %1462 = vmatprep.subr.mxu0 0.0
        %1463 = vmatpush1.msra.mxu0 0.0
        %1464 = vmatprep.subr.mxu0 0.0
        %1465 = vmatpush1.msra.mxu0 0.0
        %1466 = vmatprep.subr.mxu0 0.0
        %1467 = vmatpush1.msra.mxu0 0.0
        %1468 = vmatprep.subr.mxu0 0.0
        %1469 = vmatpush1.msra.mxu0 0.0
        %1470 = vmatprep.subr.mxu0 0.0
        %1471 = vmatpush1.msra.mxu0 0.0
        %1472 = vmatprep.subr.mxu0 0.0
        %1473 = vmatpush1.msra.mxu0 0.0
        %1474 = vmatprep.subr.mxu0 0.0
        %1475 = vmatpush1.msra.mxu0 0.0
        %1476 = vmatprep.subr.mxu0 0.0
        %1477 = vmatpush1.msra.mxu0 0.0
        %1478 = vmatprep.subr.mxu0 0.0
        %1479 = vmatpush1.msra.mxu0 0.0
        %1480 = vmatprep.subr.mxu0 0.0
        %1481 = vmatpush1.msra.mxu0 0.0
        %1482 = vmatprep.subr.mxu0 0.0
        %1483 = vmatpush1.msra.mxu0 0.0
        %1484 = vmatprep.subr.mxu0 0.0
        %1485 = vmatpush1.msra.mxu0 0.0
        %1486 = vmatprep.subr.mxu0 0.0
        %1487 = vmatpush1.msra.mxu0 0.0
        %1488 = vmatprep.subr.mxu0 0.0
        %1489 = vmatpush1.msra.mxu0 0.0
        %1490 = vmatprep.subr.mxu0 0.0
        %1491 = vmatpush1.msra.mxu0 0.0
        %1492 = vmatprep.subr.mxu0 0.0
        %1493 = vmatpush1.msra.mxu0 0.0
        %1494 = vmatprep.subr.mxu0 0.0
        %1495 = vmatpush1.msra.mxu0 0.0
        %1496 = vmatprep.subr.mxu0 0.0
        %1497 = vmatpush1.msra.mxu0 0.0
        %1498 = vmatprep.subr.mxu0 0.0
        %1499 = vmatpush1.msra.mxu0 0.0
        %1500 = vmatprep.subr.mxu0 0.0
        %1501 = vmatpush1.msra.mxu0 0.0
        %1502 = vmatprep.subr.mxu0 0.0
        %1503 = vmatpush1.msra.mxu0 0.0
        %1504 = vmatprep.subr.mxu0 0.0
        %1505 = vmatpush1.msra.mxu0 0.0
        %1506 = vmatprep.subr.mxu0 0.0
        %1507 = vmatpush1.msra.mxu0 0.0
        %1508 = vmatprep.subr.mxu0 0.0
        %1509 = vmatpush1.msra.mxu0 0.0
        %1510 = vmatprep.subr.mxu0 0.0
        %1511 = vmatpush1.msra.mxu0 0.0
        %1512 = vmatprep.subr.mxu0 0.0
        %1513 = vmatpush1.msra.mxu0 0.0
        %1514 = vmatprep.subr.mxu0 0.0
        %1515 = vmatpush1.msra.mxu0 0.0
        %1516 = vmatprep.subr.mxu0 0.0
        %1517 = vmatpush1.msra.mxu0 0.0
        %1518 = vmatprep.subr.mxu0 0.0
        %1519 = vmatpush1.msra.mxu0 0.0
        %1520 = vmatprep.mubr.f32.mxu0 0.0
        %1521 = vmatmul.mubr.f32.gmra.mrb[0].mxu0 %v1454
        %v1522 = vpop.f32.mrb[0].mxu0
        %v1523 = vadd.f32 0.0, %v1522
        %v1524 = vpop.f32.mrb[0].mxu0
        %1525 = vdwg.mxu0
        %v1527 = vsel %vm868, %v297, 0
        %1529 = vmatprep.subr.mxu0 0.0
        %1530 = vmatpush1.msra.mxu0 %v651
        %1531 = vmatprep.subr.mxu0 0.0
        %1532 = vmatpush1.msra.mxu0 0.0
        %1533 = vmatprep.subr.mxu0 0.0
        %1534 = vmatpush1.msra.mxu0 0.0
        %1535 = vmatprep.subr.mxu0 0.0
        %1536 = vmatpush1.msra.mxu0 0.0
        %1537 = vmatprep.subr.mxu0 0.0
        %1538 = vmatpush1.msra.mxu0 0.0
        %1539 = vmatprep.subr.mxu0 0.0
        %1540 = vmatpush1.msra.mxu0 0.0
        %1541 = vmatprep.subr.mxu0 0.0
        %1542 = vmatpush1.msra.mxu0 0.0
        %1543 = vmatprep.subr.mxu0 0.0
        %1544 = vmatpush1.msra.mxu0 0.0
        %1545 = vmatprep.subr.mxu0 0.0
        %1546 = vmatpush1.msra.mxu0 0.0
        %1547 = vmatprep.subr.mxu0 0.0
        %1548 = vmatpush1.msra.mxu0 0.0
        %1549 = vmatprep.subr.mxu0 0.0
        %1550 = vmatpush1.msra.mxu0 0.0
        %1551 = vmatprep.subr.mxu0 0.0
        %1552 = vmatpush1.msra.mxu0 0.0
        %1553 = vmatprep.subr.mxu0 0.0
        %1554 = vmatpush1.msra.mxu0 0.0
        %1555 = vmatprep.subr.mxu0 0.0
        %1556 = vmatpush1.msra.mxu0 0.0
        %1557 = vmatprep.subr.mxu0 0.0
        %1558 = vmatpush1.msra.mxu0 0.0
        %1559 = vmatprep.subr.mxu0 0.0
        %1560 = vmatpush1.msra.mxu0 0.0
        %1561 = vmatprep.subr.mxu0 0.0
        %1562 = vmatpush1.msra.mxu0 0.0
        %1563 = vmatprep.subr.mxu0 0.0
        %1564 = vmatpush1.msra.mxu0 0.0
        %1565 = vmatprep.subr.mxu0 0.0
        %1566 = vmatpush1.msra.mxu0 0.0
        %1567 = vmatprep.subr.mxu0 0.0
        %1568 = vmatpush1.msra.mxu0 0.0
        %1569 = vmatprep.subr.mxu0 0.0
        %1570 = vmatpush1.msra.mxu0 0.0
        %1571 = vmatprep.subr.mxu0 0.0
        %1572 = vmatpush1.msra.mxu0 0.0
        %1573 = vmatprep.subr.mxu0 0.0
        %1574 = vmatpush1.msra.mxu0 0.0
        %1575 = vmatprep.subr.mxu0 0.0
        %1576 = vmatpush1.msra.mxu0 0.0
        %1577 = vmatprep.subr.mxu0 0.0
        %1578 = vmatpush1.msra.mxu0 0.0
        %1579 = vmatprep.subr.mxu0 0.0
        %1580 = vmatpush1.msra.mxu0 0.0
        %1581 = vmatprep.subr.mxu0 0.0
        %1582 = vmatpush1.msra.mxu0 0.0
        %1583 = vmatprep.subr.mxu0 0.0
        %1584 = vmatpush1.msra.mxu0 0.0
        %1585 = vmatprep.subr.mxu0 0.0
        %1586 = vmatpush1.msra.mxu0 0.0
        %1587 = vmatprep.subr.mxu0 0.0
        %1588 = vmatpush1.msra.mxu0 0.0
        %1589 = vmatprep.subr.mxu0 0.0
        %1590 = vmatpush1.msra.mxu0 0.0
        %1591 = vmatprep.subr.mxu0 0.0
        %1592 = vmatpush1.msra.mxu0 0.0
        %1593 = vmatprep.mubr.f32.mxu0 0.0
        %1594 = vmatmul.mubr.f32.gmra.mrb[0].mxu0 %v1527
        %v1595 = vpop.f32.mrb[0].mxu0
        %v1596 = vadd.f32 0.0, %v1595
        %v1597 = vpop.f32.mrb[0].mxu0
        %1598 = vdwg.mxu0
        %v1600 = vsel %vm868, %v329, 0
        %1602 = vmatprep.subr.mxu0 0.0
        %1603 = vmatpush1.msra.mxu0 %v661
        %1604 = vmatprep.subr.mxu0 0.0
        %1605 = vmatpush1.msra.mxu0 0.0
        %1606 = vmatprep.subr.mxu0 0.0
        %1607 = vmatpush1.msra.mxu0 0.0
        %1608 = vmatprep.subr.mxu0 0.0
        %1609 = vmatpush1.msra.mxu0 0.0
        %1610 = vmatprep.subr.mxu0 0.0
        %1611 = vmatpush1.msra.mxu0 0.0
        %1612 = vmatprep.subr.mxu0 0.0
        %1613 = vmatpush1.msra.mxu0 0.0
        %1614 = vmatprep.subr.mxu0 0.0
        %1615 = vmatpush1.msra.mxu0 0.0
        %1616 = vmatprep.subr.mxu0 0.0
        %1617 = vmatpush1.msra.mxu0 0.0
        %1618 = vmatprep.subr.mxu0 0.0
        %1619 = vmatpush1.msra.mxu0 0.0
        %1620 = vmatprep.subr.mxu0 0.0
        %1621 = vmatpush1.msra.mxu0 0.0
        %1622 = vmatprep.subr.mxu0 0.0
        %1623 = vmatpush1.msra.mxu0 0.0
        %1624 = vmatprep.subr.mxu0 0.0
        %1625 = vmatpush1.msra.mxu0 0.0
        %1626 = vmatprep.subr.mxu0 0.0
        %1627 = vmatpush1.msra.mxu0 0.0
        %1628 = vmatprep.subr.mxu0 0.0
        %1629 = vmatpush1.msra.mxu0 0.0
        %1630 = vmatprep.subr.mxu0 0.0
        %1631 = vmatpush1.msra.mxu0 0.0
        %1632 = vmatprep.subr.mxu0 0.0
        %1633 = vmatpush1.msra.mxu0 0.0
        %1634 = vmatprep.subr.mxu0 0.0
        %1635 = vmatpush1.msra.mxu0 0.0
        %1636 = vmatprep.subr.mxu0 0.0
        %1637 = vmatpush1.msra.mxu0 0.0
        %1638 = vmatprep.subr.mxu0 0.0
        %1639 = vmatpush1.msra.mxu0 0.0
        %1640 = vmatprep.subr.mxu0 0.0
        %1641 = vmatpush1.msra.mxu0 0.0
        %1642 = vmatprep.subr.mxu0 0.0
        %1643 = vmatpush1.msra.mxu0 0.0
        %1644 = vmatprep.subr.mxu0 0.0
        %1645 = vmatpush1.msra.mxu0 0.0
        %1646 = vmatprep.subr.mxu0 0.0
        %1647 = vmatpush1.msra.mxu0 0.0
        %1648 = vmatprep.subr.mxu0 0.0
        %1649 = vmatpush1.msra.mxu0 0.0
        %1650 = vmatprep.subr.mxu0 0.0
        %1651 = vmatpush1.msra.mxu0 0.0
        %1652 = vmatprep.subr.mxu0 0.0
        %1653 = vmatpush1.msra.mxu0 0.0
        %1654 = vmatprep.subr.mxu0 0.0
        %1655 = vmatpush1.msra.mxu0 0.0
        %1656 = vmatprep.subr.mxu0 0.0
        %1657 = vmatpush1.msra.mxu0 0.0
        %1658 = vmatprep.subr.mxu0 0.0
        %1659 = vmatpush1.msra.mxu0 0.0
        %1660 = vmatprep.subr.mxu0 0.0
        %1661 = vmatpush1.msra.mxu0 0.0
        %1662 = vmatprep.subr.mxu0 0.0
        %1663 = vmatpush1.msra.mxu0 0.0
        %1664 = vmatprep.subr.mxu0 0.0
        %1665 = vmatpush1.msra.mxu0 0.0
        %1666 = vmatprep.mubr.f32.mxu0 0.0
        %1667 = vmatmul.mubr.f32.gmra.mrb[0].mxu0 %v1600
        %v1668 = vpop.f32.mrb[0].mxu0
        %v1669 = vadd.f32 0.0, %v1668
        %v1670 = vpop.f32.mrb[0].mxu0
        %1671 = vdwg.mxu0
        %v1673 = vsel %vm868, %v361, 0
        %1675 = vmatprep.subr.mxu0 0.0
        %1676 = vmatpush1.msra.mxu0 %v671
        %1677 = vmatprep.subr.mxu0 0.0
        %1678 = vmatpush1.msra.mxu0 0.0
        %1679 = vmatprep.subr.mxu0 0.0
        %1680 = vmatpush1.msra.mxu0 0.0
        %1681 = vmatprep.subr.mxu0 0.0
        %1682 = vmatpush1.msra.mxu0 0.0
        %1683 = vmatprep.subr.mxu0 0.0
        %1684 = vmatpush1.msra.mxu0 0.0
        %1685 = vmatprep.subr.mxu0 0.0
        %1686 = vmatpush1.msra.mxu0 0.0
        %1687 = vmatprep.subr.mxu0 0.0
        %1688 = vmatpush1.msra.mxu0 0.0
        %1689 = vmatprep.subr.mxu0 0.0
        %1690 = vmatpush1.msra.mxu0 0.0
        %1691 = vmatprep.subr.mxu0 0.0
        %1692 = vmatpush1.msra.mxu0 0.0
        %1693 = vmatprep.subr.mxu0 0.0
        %1694 = vmatpush1.msra.mxu0 0.0
        %1695 = vmatprep.subr.mxu0 0.0
        %1696 = vmatpush1.msra.mxu0 0.0
        %1697 = vmatprep.subr.mxu0 0.0
        %1698 = vmatpush1.msra.mxu0 0.0
        %1699 = vmatprep.subr.mxu0 0.0
        %1700 = vmatpush1.msra.mxu0 0.0
        %1701 = vmatprep.subr.mxu0 0.0
        %1702 = vmatpush1.msra.mxu0 0.0
        %1703 = vmatprep.subr.mxu0 0.0
        %1704 = vmatpush1.msra.mxu0 0.0
        %1705 = vmatprep.subr.mxu0 0.0
        %1706 = vmatpush1.msra.mxu0 0.0
        %1707 = vmatprep.subr.mxu0 0.0
        %1708 = vmatpush1.msra.mxu0 0.0
        %1709 = vmatprep.subr.mxu0 0.0
        %1710 = vmatpush1.msra.mxu0 0.0
        %1711 = vmatprep.subr.mxu0 0.0
        %1712 = vmatpush1.msra.mxu0 0.0
        %1713 = vmatprep.subr.mxu0 0.0
        %1714 = vmatpush1.msra.mxu0 0.0
        %1715 = vmatprep.subr.mxu0 0.0
        %1716 = vmatpush1.msra.mxu0 0.0
        %1717 = vmatprep.subr.mxu0 0.0
        %1718 = vmatpush1.msra.mxu0 0.0
        %1719 = vmatprep.subr.mxu0 0.0
        %1720 = vmatpush1.msra.mxu0 0.0
        %1721 = vmatprep.subr.mxu0 0.0
        %1722 = vmatpush1.msra.mxu0 0.0
        %1723 = vmatprep.subr.mxu0 0.0
        %1724 = vmatpush1.msra.mxu0 0.0
        %1725 = vmatprep.subr.mxu0 0.0
        %1726 = vmatpush1.msra.mxu0 0.0
        %1727 = vmatprep.subr.mxu0 0.0
        %1728 = vmatpush1.msra.mxu0 0.0
        %1729 = vmatprep.subr.mxu0 0.0
        %1730 = vmatpush1.msra.mxu0 0.0
        %1731 = vmatprep.subr.mxu0 0.0
        %1732 = vmatpush1.msra.mxu0 0.0
        %1733 = vmatprep.subr.mxu0 0.0
        %1734 = vmatpush1.msra.mxu0 0.0
        %1735 = vmatprep.subr.mxu0 0.0
        %1736 = vmatpush1.msra.mxu0 0.0
        %1737 = vmatprep.subr.mxu0 0.0
        %1738 = vmatpush1.msra.mxu0 0.0
        %1739 = vmatprep.mubr.f32.mxu0 0.0
        %1740 = vmatmul.mubr.f32.gmra.mrb[0].mxu0 %v1673
        %v1741 = vpop.f32.mrb[0].mxu0
        %v1742 = vadd.f32 0.0, %v1741
        %v1743 = vpop.f32.mrb[0].mxu0
        %1744 = vdwg.mxu0
        %v1746 = vsel %vm868, %v393, 0
        %1748 = vmatprep.subr.mxu0 0.0
        %1749 = vmatpush1.msra.mxu0 %v681
        %1750 = vmatprep.subr.mxu0 0.0
        %1751 = vmatpush1.msra.mxu0 0.0
        %1752 = vmatprep.subr.mxu0 0.0
        %1753 = vmatpush1.msra.mxu0 0.0
        %1754 = vmatprep.subr.mxu0 0.0
        %1755 = vmatpush1.msra.mxu0 0.0
        %1756 = vmatprep.subr.mxu0 0.0
        %1757 = vmatpush1.msra.mxu0 0.0
        %1758 = vmatprep.subr.mxu0 0.0
        %1759 = vmatpush1.msra.mxu0 0.0
        %1760 = vmatprep.subr.mxu0 0.0
        %1761 = vmatpush1.msra.mxu0 0.0
        %1762 = vmatprep.subr.mxu0 0.0
        %1763 = vmatpush1.msra.mxu0 0.0
        %1764 = vmatprep.subr.mxu0 0.0
        %1765 = vmatpush1.msra.mxu0 0.0
        %1766 = vmatprep.subr.mxu0 0.0
        %1767 = vmatpush1.msra.mxu0 0.0
        %1768 = vmatprep.subr.mxu0 0.0
        %1769 = vmatpush1.msra.mxu0 0.0
        %1770 = vmatprep.subr.mxu0 0.0
        %1771 = vmatpush1.msra.mxu0 0.0
        %1772 = vmatprep.subr.mxu0 0.0
        %1773 = vmatpush1.msra.mxu0 0.0
        %1774 = vmatprep.subr.mxu0 0.0
        %1775 = vmatpush1.msra.mxu0 0.0
        %1776 = vmatprep.subr.mxu0 0.0
        %1777 = vmatpush1.msra.mxu0 0.0
        %1778 = vmatprep.subr.mxu0 0.0
        %1779 = vmatpush1.msra.mxu0 0.0
        %1780 = vmatprep.subr.mxu0 0.0
        %1781 = vmatpush1.msra.mxu0 0.0
        %1782 = vmatprep.subr.mxu0 0.0
        %1783 = vmatpush1.msra.mxu0 0.0
        %1784 = vmatprep.subr.mxu0 0.0
        %1785 = vmatpush1.msra.mxu0 0.0
        %1786 = vmatprep.subr.mxu0 0.0
        %1787 = vmatpush1.msra.mxu0 0.0
        %1788 = vmatprep.subr.mxu0 0.0
        %1789 = vmatpush1.msra.mxu0 0.0
        %1790 = vmatprep.subr.mxu0 0.0
        %1791 = vmatpush1.msra.mxu0 0.0
        %1792 = vmatprep.subr.mxu0 0.0
        %1793 = vmatpush1.msra.mxu0 0.0
        %1794 = vmatprep.subr.mxu0 0.0
        %1795 = vmatpush1.msra.mxu0 0.0
        %1796 = vmatprep.subr.mxu0 0.0
        %1797 = vmatpush1.msra.mxu0 0.0
        %1798 = vmatprep.subr.mxu0 0.0
        %1799 = vmatpush1.msra.mxu0 0.0
        %1800 = vmatprep.subr.mxu0 0.0
        %1801 = vmatpush1.msra.mxu0 0.0
        %1802 = vmatprep.subr.mxu0 0.0
        %1803 = vmatpush1.msra.mxu0 0.0
        %1804 = vmatprep.subr.mxu0 0.0
        %1805 = vmatpush1.msra.mxu0 0.0
        %1806 = vmatprep.subr.mxu0 0.0
        %1807 = vmatpush1.msra.mxu0 0.0
        %1808 = vmatprep.subr.mxu0 0.0
        %1809 = vmatpush1.msra.mxu0 0.0
        %1810 = vmatprep.subr.mxu0 0.0
        %1811 = vmatpush1.msra.mxu0 0.0
        %1812 = vmatprep.mubr.f32.mxu0 0.0
        %1813 = vmatmul.mubr.f32.gmra.mrb[0].mxu0 %v1746
        %v1814 = vpop.f32.mrb[0].mxu0
        %v1815 = vadd.f32 0.0, %v1814
        %v1816 = vpop.f32.mrb[0].mxu0
        %1817 = vdwg.mxu0
        %v1819 = vsel %vm868, %v425, 0
        %1821 = vmatprep.subr.mxu0 0.0
        %1822 = vmatpush1.msra.mxu0 %v691
        %1823 = vmatprep.subr.mxu0 0.0
        %1824 = vmatpush1.msra.mxu0 0.0
        %1825 = vmatprep.subr.mxu0 0.0
        %1826 = vmatpush1.msra.mxu0 0.0
        %1827 = vmatprep.subr.mxu0 0.0
        %1828 = vmatpush1.msra.mxu0 0.0
        %1829 = vmatprep.subr.mxu0 0.0
        %1830 = vmatpush1.msra.mxu0 0.0
        %1831 = vmatprep.subr.mxu0 0.0
        %1832 = vmatpush1.msra.mxu0 0.0
        %1833 = vmatprep.subr.mxu0 0.0
        %1834 = vmatpush1.msra.mxu0 0.0
        %1835 = vmatprep.subr.mxu0 0.0
        %1836 = vmatpush1.msra.mxu0 0.0
        %1837 = vmatprep.subr.mxu0 0.0
        %1838 = vmatpush1.msra.mxu0 0.0
        %1839 = vmatprep.subr.mxu0 0.0
        %1840 = vmatpush1.msra.mxu0 0.0
        %1841 = vmatprep.subr.mxu0 0.0
        %1842 = vmatpush1.msra.mxu0 0.0
        %1843 = vmatprep.subr.mxu0 0.0
        %1844 = vmatpush1.msra.mxu0 0.0
        %1845 = vmatprep.subr.mxu0 0.0
        %1846 = vmatpush1.msra.mxu0 0.0
        %1847 = vmatprep.subr.mxu0 0.0
        %1848 = vmatpush1.msra.mxu0 0.0
        %1849 = vmatprep.subr.mxu0 0.0
        %1850 = vmatpush1.msra.mxu0 0.0
        %1851 = vmatprep.subr.mxu0 0.0
        %1852 = vmatpush1.msra.mxu0 0.0
        %1853 = vmatprep.subr.mxu0 0.0
        %1854 = vmatpush1.msra.mxu0 0.0
        %1855 = vmatprep.subr.mxu0 0.0
        %1856 = vmatpush1.msra.mxu0 0.0
        %1857 = vmatprep.subr.mxu0 0.0
        %1858 = vmatpush1.msra.mxu0 0.0
        %1859 = vmatprep.subr.mxu0 0.0
        %1860 = vmatpush1.msra.mxu0 0.0
        %1861 = vmatprep.subr.mxu0 0.0
        %1862 = vmatpush1.msra.mxu0 0.0
        %1863 = vmatprep.subr.mxu0 0.0
        %1864 = vmatpush1.msra.mxu0 0.0
        %1865 = vmatprep.subr.mxu0 0.0
        %1866 = vmatpush1.msra.mxu0 0.0
        %1867 = vmatprep.subr.mxu0 0.0
        %1868 = vmatpush1.msra.mxu0 0.0
        %1869 = vmatprep.subr.mxu0 0.0
        %1870 = vmatpush1.msra.mxu0 0.0
        %1871 = vmatprep.subr.mxu0 0.0
        %1872 = vmatpush1.msra.mxu0 0.0
        %1873 = vmatprep.subr.mxu0 0.0
        %1874 = vmatpush1.msra.mxu0 0.0
        %1875 = vmatprep.subr.mxu0 0.0
        %1876 = vmatpush1.msra.mxu0 0.0
        %1877 = vmatprep.subr.mxu0 0.0
        %1878 = vmatpush1.msra.mxu0 0.0
        %1879 = vmatprep.subr.mxu0 0.0
        %1880 = vmatpush1.msra.mxu0 0.0
        %1881 = vmatprep.subr.mxu0 0.0
        %1882 = vmatpush1.msra.mxu0 0.0
        %1883 = vmatprep.subr.mxu0 0.0
        %1884 = vmatpush1.msra.mxu0 0.0
        %1885 = vmatprep.mubr.f32.mxu0 0.0
        %1886 = vmatmul.mubr.f32.gmra.mrb[0].mxu0 %v1819
        %v1887 = vpop.f32.mrb[0].mxu0
        %v1888 = vadd.f32 0.0, %v1887
        %v1889 = vpop.f32.mrb[0].mxu0
        %1890 = vdwg.mxu0
        %v1892 = vsel %vm868, %v457, 0
        %1894 = vmatprep.subr.mxu0 0.0
        %1895 = vmatpush1.msra.mxu0 %v701
        %1896 = vmatprep.subr.mxu0 0.0
        %1897 = vmatpush1.msra.mxu0 0.0
        %1898 = vmatprep.subr.mxu0 0.0
        %1899 = vmatpush1.msra.mxu0 0.0
        %1900 = vmatprep.subr.mxu0 0.0
        %1901 = vmatpush1.msra.mxu0 0.0
        %1902 = vmatprep.subr.mxu0 0.0
        %1903 = vmatpush1.msra.mxu0 0.0
        %1904 = vmatprep.subr.mxu0 0.0
        %1905 = vmatpush1.msra.mxu0 0.0
        %1906 = vmatprep.subr.mxu0 0.0
        %1907 = vmatpush1.msra.mxu0 0.0
        %1908 = vmatprep.subr.mxu0 0.0
        %1909 = vmatpush1.msra.mxu0 0.0
        %1910 = vmatprep.subr.mxu0 0.0
        %1911 = vmatpush1.msra.mxu0 0.0
        %1912 = vmatprep.subr.mxu0 0.0
        %1913 = vmatpush1.msra.mxu0 0.0
        %1914 = vmatprep.subr.mxu0 0.0
        %1915 = vmatpush1.msra.mxu0 0.0
        %1916 = vmatprep.subr.mxu0 0.0
        %1917 = vmatpush1.msra.mxu0 0.0
        %1918 = vmatprep.subr.mxu0 0.0
        %1919 = vmatpush1.msra.mxu0 0.0
        %1920 = vmatprep.subr.mxu0 0.0
        %1921 = vmatpush1.msra.mxu0 0.0
        %1922 = vmatprep.subr.mxu0 0.0
        %1923 = vmatpush1.msra.mxu0 0.0
        %1924 = vmatprep.subr.mxu0 0.0
        %1925 = vmatpush1.msra.mxu0 0.0
        %1926 = vmatprep.subr.mxu0 0.0
        %1927 = vmatpush1.msra.mxu0 0.0
        %1928 = vmatprep.subr.mxu0 0.0
        %1929 = vmatpush1.msra.mxu0 0.0
        %1930 = vmatprep.subr.mxu0 0.0
        %1931 = vmatpush1.msra.mxu0 0.0
        %1932 = vmatprep.subr.mxu0 0.0
        %1933 = vmatpush1.msra.mxu0 0.0
        %1934 = vmatprep.subr.mxu0 0.0
        %1935 = vmatpush1.msra.mxu0 0.0
        %1936 = vmatprep.subr.mxu0 0.0
        %1937 = vmatpush1.msra.mxu0 0.0
        %1938 = vmatprep.subr.mxu0 0.0
        %1939 = vmatpush1.msra.mxu0 0.0
        %1940 = vmatprep.subr.mxu0 0.0
        %1941 = vmatpush1.msra.mxu0 0.0
        %1942 = vmatprep.subr.mxu0 0.0
        %1943 = vmatpush1.msra.mxu0 0.0
        %1944 = vmatprep.subr.mxu0 0.0
        %1945 = vmatpush1.msra.mxu0 0.0
        %1946 = vmatprep.subr.mxu0 0.0
        %1947 = vmatpush1.msra.mxu0 0.0
        %1948 = vmatprep.subr.mxu0 0.0
        %1949 = vmatpush1.msra.mxu0 0.0
        %1950 = vmatprep.subr.mxu0 0.0
        %1951 = vmatpush1.msra.mxu0 0.0
        %1952 = vmatprep.subr.mxu0 0.0
        %1953 = vmatpush1.msra.mxu0 0.0
        %1954 = vmatprep.subr.mxu0 0.0
        %1955 = vmatpush1.msra.mxu0 0.0
        %1956 = vmatprep.subr.mxu0 0.0
        %1957 = vmatpush1.msra.mxu0 0.0
        %1958 = vmatprep.mubr.f32.mxu0 0.0
        %1959 = vmatmul.mubr.f32.gmra.mrb[0].mxu0 %v1892
        %v1960 = vpop.f32.mrb[0].mxu0
        %v1961 = vadd.f32 0.0, %v1960
        %v1962 = vpop.f32.mrb[0].mxu0
        %1963 = vdwg.mxu0
        %v1965 = vsel %vm868, %v489, 0
        %1967 = vmatprep.subr.mxu0 0.0
        %1968 = vmatpush1.msra.mxu0 %v711
        %1969 = vmatprep.subr.mxu0 0.0
        %1970 = vmatpush1.msra.mxu0 0.0
        %1971 = vmatprep.subr.mxu0 0.0
        %1972 = vmatpush1.msra.mxu0 0.0
        %1973 = vmatprep.subr.mxu0 0.0
        %1974 = vmatpush1.msra.mxu0 0.0
        %1975 = vmatprep.subr.mxu0 0.0
        %1976 = vmatpush1.msra.mxu0 0.0
        %1977 = vmatprep.subr.mxu0 0.0
        %1978 = vmatpush1.msra.mxu0 0.0
        %1979 = vmatprep.subr.mxu0 0.0
        %1980 = vmatpush1.msra.mxu0 0.0
        %1981 = vmatprep.subr.mxu0 0.0
        %1982 = vmatpush1.msra.mxu0 0.0
        %1983 = vmatprep.subr.mxu0 0.0
        %1984 = vmatpush1.msra.mxu0 0.0
        %1985 = vmatprep.subr.mxu0 0.0
        %1986 = vmatpush1.msra.mxu0 0.0
        %1987 = vmatprep.subr.mxu0 0.0
        %1988 = vmatpush1.msra.mxu0 0.0
        %1989 = vmatprep.subr.mxu0 0.0
        %1990 = vmatpush1.msra.mxu0 0.0
        %1991 = vmatprep.subr.mxu0 0.0
        %1992 = vmatpush1.msra.mxu0 0.0
        %1993 = vmatprep.subr.mxu0 0.0
        %1994 = vmatpush1.msra.mxu0 0.0
        %1995 = vmatprep.subr.mxu0 0.0
        %1996 = vmatpush1.msra.mxu0 0.0
        %1997 = vmatprep.subr.mxu0 0.0
        %1998 = vmatpush1.msra.mxu0 0.0
        %1999 = vmatprep.subr.mxu0 0.0
        %2000 = vmatpush1.msra.mxu0 0.0
        %2001 = vmatprep.subr.mxu0 0.0
        %2002 = vmatpush1.msra.mxu0 0.0
        %2003 = vmatprep.subr.mxu0 0.0
        %2004 = vmatpush1.msra.mxu0 0.0
        %2005 = vmatprep.subr.mxu0 0.0
        %2006 = vmatpush1.msra.mxu0 0.0
        %2007 = vmatprep.subr.mxu0 0.0
        %2008 = vmatpush1.msra.mxu0 0.0
        %2009 = vmatprep.subr.mxu0 0.0
        %2010 = vmatpush1.msra.mxu0 0.0
        %2011 = vmatprep.subr.mxu0 0.0
        %2012 = vmatpush1.msra.mxu0 0.0
        %2013 = vmatprep.subr.mxu0 0.0
        %2014 = vmatpush1.msra.mxu0 0.0
        %2015 = vmatprep.subr.mxu0 0.0
        %2016 = vmatpush1.msra.mxu0 0.0
        %2017 = vmatprep.subr.mxu0 0.0
        %2018 = vmatpush1.msra.mxu0 0.0
        %2019 = vmatprep.subr.mxu0 0.0
        %2020 = vmatpush1.msra.mxu0 0.0
        %2021 = vmatprep.subr.mxu0 0.0
        %2022 = vmatpush1.msra.mxu0 0.0
        %2023 = vmatprep.subr.mxu0 0.0
        %2024 = vmatpush1.msra.mxu0 0.0
        %2025 = vmatprep.subr.mxu0 0.0
        %2026 = vmatpush1.msra.mxu0 0.0
        %2027 = vmatprep.subr.mxu0 0.0
        %2028 = vmatpush1.msra.mxu0 0.0
        %2029 = vmatprep.subr.mxu0 0.0
        %2030 = vmatpush1.msra.mxu0 0.0
        %2031 = vmatprep.mubr.f32.mxu0 0.0
        %2032 = vmatmul.mubr.f32.gmra.mrb[0].mxu0 %v1965
        %v2033 = vpop.f32.mrb[0].mxu0
        %v2034 = vadd.f32 0.0, %v2033
        %v2035 = vpop.f32.mrb[0].mxu0
        %2036 = vdwg.mxu0
        %v2037 = vsel %vm868, %v241, 0.0
        %2038 = vadd.xlane.f32.xlu0 %v2037
        %v2039 = vpop.xlane.xlu0 %2038
        %v2040 = vsel %vm868, %v242, 0.0
        %2041 = vadd.xlane.f32.xlu0 %v2040
        %v2042 = vpop.xlane.xlu0 %2041
        %v2043 = vsel %vm868, %v243, 0.0
        %2044 = vadd.xlane.f32.xlu0 %v2043
        %v2045 = vpop.xlane.xlu0 %2044
        %v2046 = vsel %vm868, %v244, 0.0
        %2047 = vadd.xlane.f32.xlu0 %v2046
        %v2048 = vpop.xlane.xlu0 %2047
        %v2049 = vsel %vm868, %v245, 0.0
        %2050 = vadd.xlane.f32.xlu0 %v2049
        %v2051 = vpop.xlane.xlu0 %2050
        %v2052 = vsel %vm868, %v246, 0.0
        %2053 = vadd.xlane.f32.xlu0 %v2052
        %v2054 = vpop.xlane.xlu0 %2053
        %v2055 = vsel %vm868, %v247, 0.0
        %2056 = vadd.xlane.f32.xlu0 %v2055
        %v2057 = vpop.xlane.xlu0 %2056
        %v2058 = vsel %vm868, %v248, 0.0
        %2059 = vadd.xlane.f32.xlu0 %v2058
        %v2060 = vpop.xlane.xlu0 %2059
        %v2061 = vsel %vm868, %v265, 0.0
        %2062 = vadd.xlane.f32.xlu0 %v2061
        %v2063 = vpop.xlane.xlu0 %2062
        %v2064 = vsel %vm868, %v297, 0.0
        %2065 = vadd.xlane.f32.xlu0 %v2064
        %v2066 = vpop.xlane.xlu0 %2065
        %v2067 = vsel %vm868, %v329, 0.0
        %2068 = vadd.xlane.f32.xlu0 %v2067
        %v2069 = vpop.xlane.xlu0 %2068
        %v2070 = vsel %vm868, %v361, 0.0
        %2071 = vadd.xlane.f32.xlu0 %v2070
        %v2072 = vpop.xlane.xlu0 %2071
        %v2073 = vsel %vm868, %v393, 0.0
        %2074 = vadd.xlane.f32.xlu0 %v2073
        %v2075 = vpop.xlane.xlu0 %2074
        %v2076 = vsel %vm868, %v425, 0.0
        %2077 = vadd.xlane.f32.xlu0 %v2076
        %v2078 = vpop.xlane.xlu0 %2077
        %v2079 = vsel %vm868, %v457, 0.0
        %2080 = vadd.xlane.f32.xlu0 %v2079
        %v2081 = vpop.xlane.xlu0 %2080
        %v2082 = vsel %vm868, %v489, 0.0
        %2083 = vadd.xlane.f32.xlu0 %v2082
        %v2084 = vpop.xlane.xlu0 %2083
        %v2085 = vadd.f32 %v790, %v939
        %v2086 = vadd.f32 %v800, %v1012
        %v2087 = vadd.f32 %v810, %v1085
        %v2088 = vadd.f32 %v820, %v1158
        %v2089 = vadd.f32 %v830, %v1231
        %v2090 = vadd.f32 %v840, %v1304
        %v2091 = vadd.f32 %v850, %v1377
        %v2092 = vadd.f32 %v860, %v1450
        %v2093 = vmul.f32 %v2039, %v641
        %v2094 = vmul.f32 %v2042, %v651
        %v2095 = vmul.f32 %v2045, %v661
        %v2096 = vmul.f32 %v2048, %v671
        %v2097 = vmul.f32 %v2051, %v681
        %v2098 = vmul.f32 %v2054, %v691
        %v2099 = vmul.f32 %v2057, %v701
        %v2100 = vmul.f32 %v2060, %v711
        %v2101 = vsub.f32 %v2085, %v2093
        %v2102 = vsub.f32 %v2086, %v2094
        %v2103 = vsub.f32 %v2087, %v2095
        %v2104 = vsub.f32 %v2088, %v2096
        %v2105 = vsub.f32 %v2089, %v2097
        %v2106 = vsub.f32 %v2090, %v2098
        %v2107 = vsub.f32 %v2091, %v2099
        %v2108 = vsub.f32 %v2092, %v2100
        %2109 = vst.msk [vmem:[%s232] sm:$0xff] %vm525, %v2101
        %2110 = vst.msk [vmem:[%s232 + $0x10] sm:$0xff] %vm525, %v2102
        %2111 = vst.msk [vmem:[%s232 + $0x20] sm:$0xff] %vm525, %v2103
        %2112 = vst.msk [vmem:[%s232 + $0x30] sm:$0xff] %vm525, %v2104
        %2113 = vst.msk [vmem:[%s232 + $0x40] sm:$0xff] %vm525, %v2105
        %2114 = vst.msk [vmem:[%s232 + $0x50] sm:$0xff] %vm525, %v2106
        %2115 = vst.msk [vmem:[%s232 + $0x60] sm:$0xff] %vm525, %v2107
        %2116 = vst.msk [vmem:[%s232 + $0x70] sm:$0xff] %vm525, %v2108
        %v2117 = vadd.f32 %v795, %v1523
        %v2118 = vadd.f32 %v805, %v1596
        %v2119 = vadd.f32 %v815, %v1669
        %v2120 = vadd.f32 %v825, %v1742
        %v2121 = vadd.f32 %v835, %v1815
        %v2122 = vadd.f32 %v845, %v1888
        %v2123 = vadd.f32 %v855, %v1961
        %v2124 = vadd.f32 %v865, %v2034
        %v2125 = vmul.f32 %v2063, %v646
        %v2126 = vmul.f32 %v2066, %v656
        %v2127 = vmul.f32 %v2069, %v666
        %v2128 = vmul.f32 %v2072, %v676
        %v2129 = vmul.f32 %v2075, %v686
        %v2130 = vmul.f32 %v2078, %v696
        %v2131 = vmul.f32 %v2081, %v706
        %v2132 = vmul.f32 %v2084, %v716
        %v2133 = vsub.f32 %v2117, %v2125
        %v2134 = vsub.f32 %v2118, %v2126
        %v2135 = vsub.f32 %v2119, %v2127
        %v2136 = vsub.f32 %v2120, %v2128
        %v2137 = vsub.f32 %v2121, %v2129
        %v2138 = vsub.f32 %v2122, %v2130
        %v2139 = vsub.f32 %v2123, %v2131
        %v2140 = vsub.f32 %v2124, %v2132
        %2141 = vst.msk [vmem:[%s232 + $0x8] sm:$0xff] %vm525, %v2133
        %2142 = vst.msk [vmem:[%s232 + $0x18] sm:$0xff] %vm525, %v2134
        %2143 = vst.msk [vmem:[%s232 + $0x28] sm:$0xff] %vm525, %v2135
        %2144 = vst.msk [vmem:[%s232 + $0x38] sm:$0xff] %vm525, %v2136
        %2145 = vst.msk [vmem:[%s232 + $0x48] sm:$0xff] %vm525, %v2137
        %2146 = vst.msk [vmem:[%s232 + $0x58] sm:$0xff] %vm525, %v2138
        %2147 = vst.msk [vmem:[%s232 + $0x68] sm:$0xff] %vm525, %v2139
        %2148 = vst.msk [vmem:[%s232 + $0x78] sm:$0xff] %vm525, %v2140
        %s2149 = sand.u32 %s123, 1
        %s2150 = scalar_lea.sflag [#allocation4], %s2149
        %s2151 = sand.u32 %s123, 1
        %s2152 = smul.addr %s2151, 128
        %s2153 = scalar_lea.vmem [#allocation5], %s2152
        // Predicated region
        $region41: #{tpu_custom_call.1} parent=35 // pred_check
          %p2154 = pneg %p133
        $region42: #{tpu_custom_call.1} parent=35 // pred_check_branch
          %2156 = sbr.rel (%p2154) target = $region44
        $region43: #{tpu_custom_call.1} parent=35 // pred_region
          %s2157 = smul.u32 8, %s21
          %s2159 = ssub.s32 2048, 2048
          %2160 = vsyncadd %s2150, %s2159
          %s2161 = smul.addr %s2157, 2
          %s2162 = smul.addr %s2161, 128
          %s2163 = scalar_lea.hbm %s4, %s2162
          %s2164 = sshll.u32 %s2153, 4
          %s2165 = int_to_ptr.vmem [resolvable:$true] %s2164
          %2170 = dma.vmem_to_hbm [thread:$0]  %s2165, 2048, %s2163, %s2150, 128, 128, 8
        $region44: #{tpu_custom_call.1} parent=35 // pred_fallthru
          _
      $region36: #{tpu_custom_call.1} parent=5 // pred_fallthru
        _
      %p2171 = scmp.le.s32.totalorder 2, %s16
      // Predicated region
      $region45: #{tpu_custom_call.1} parent=5 // pred_check
        %p2172 = pneg %p2171
      $region46: #{tpu_custom_call.1} parent=5 // pred_check_branch
        %2174 = sbr.rel (%p2172) target = $region48
      $region47: #{tpu_custom_call.1} parent=5 // pred_region
        %s2175 = ssub.s32 %s16, 2
        // Predicated region
        $region49: #{tpu_custom_call.1} parent=47 // pred_check
          %p2176 = pneg %p139
        $region50: #{tpu_custom_call.1} parent=47 // pred_check_branch
          %2178 = sbr.rel (%p2176) target = $region52
        $region51: #{tpu_custom_call.1} parent=47 // pred_region
          %s2179 = sand.u32 %s124, 1
          %s2180 = scalar_lea.sflag [#allocation4], %s2179
          %s2181 = sand.u32 %s124, 1
          %s2182 = smul.addr %s2181, 128
          %s2183 = scalar_lea.vmem [#allocation5], %s2182
          %2184 = dma.done %s2180, 2048
        $region52: #{tpu_custom_call.1} parent=47 // pred_fallthru
          _
      $region48: #{tpu_custom_call.1} parent=5 // pred_fallthru
        _
    $region6: #{tpu_custom_call.1} parent=1 // loop_footer
      %s20 = sadd.s32 1, %s16
    $region7: #{tpu_custom_call.1} parent=1 // loop_footer_branch
      %15 = sbr.rel target = $region3
    $region8: #{tpu_custom_call.1} parent=1 // loop_exit
      _
    %2185 = vsyncpa [#allocation3], 1
    %s2186 = scalar_lea.sflag [#allocation3], 1
    %2187 = vsyncpa %s2186, 1
    %2188 = vsyncpa [#allocation4], 1
    %s2189 = scalar_lea.sflag [#allocation4], 1
    %2190 = vsyncpa %s2189, 1

</llo_original>
